<compile_context>
chip_gen: v6e
topology: v6e:2x2x1
jax: 0.10.0
libtpu: 0.0.40
codegen_flags: <defaults>
</compile_context>

<pallas_src>
import jax
import jax.numpy as jnp
from jax import lax
from jax.experimental import pallas as pl
from jax.experimental.pallas import tpu as pltpu


# ---------------------------------------------------------------------------
# In-kernel helpers
# ---------------------------------------------------------------------------
def _mish(x):
    # mish(x) = x * tanh(softplus(x)) with one transcendental:
    # tanh(log1p(e^x)) = t*(t+2) / (t*(t+2)+2),  t = e^min(x, 20)
    # (for x > 20 the ratio rounds to 1.0 in f32, matching torch's softplus threshold).
    t = jnp.exp(jnp.minimum(x, 20.0))
    num = t * (t + 2.0)
    # approx=True would move the divide fully onto the EUP but costs ~1e-4 rel. error,
    # which would eat the whole parity budget; keep the exact reciprocal.
    return x * num * pl.reciprocal(num + 2.0, approx=False)


def _fused_kernel(x_ref, a1_ref, b1_ref, uh_ref, bw_ref, b2_ref, o_ref):
    """Whole PSUpsampleConv forward for one image (everything stays in VMEM).

    x_ref : (1, H, W*Cin)        input slab (NHWC flattened over (W, C))
    a1_ref: (3, W*Cin, W*Cin)    pre_conv tap-row band matrices (W 'same' pad baked in)
    b1_ref: (1, W*Cin)           pre_conv bias tiled across W
    uh_ref: (3, Ho, H)           bilinear row-interp matrices, pre-shifted per conv2 tap row
    bw_ref: (3, W*Cin, Wo*Cout)  bilinear col-interp folded into conv2 band matrices
    b2_ref: (1, Wo*Cout)         conv bias tiled across Wo
    o_ref : (1, Ho, Wo*Cout)     lane-dense output slab
    """
    f32 = jnp.float32
    H = x_ref.shape[1]
    x = x_ref[0]                                                       # (H, W*Cin)

    # ---- pre_conv (3x3 'same', Cin -> Cin): 3 banded matmuls + row-shift matmuls ----
    t0 = jnp.dot(x, a1_ref[0], preferred_element_type=f32)             # tap row kh=0
    t1 = jnp.dot(x, a1_ref[1], preferred_element_type=f32)             # tap row kh=1
    t2 = jnp.dot(x, a1_ref[2], preferred_element_type=f32)             # tap row kh=2
    row = lax.broadcasted_iota(jnp.int32, (H, H), 0)
    col = lax.broadcasted_iota(jnp.int32, (H, H), 1)
    s_dn = (row == col + 1).astype(f32)        # out[h] += t0[h-1]  (zero at h=0)
    s_up = (row + 1 == col).astype(f32)        # out[h] += t2[h+1]  (zero at h=H-1)
    y1 = (t1
          + jnp.dot(s_dn, t0, preferred_element_type=f32)
          + jnp.dot(s_up, t2, preferred_element_type=f32))
    y1 = _mish(y1 + b1_ref[...])                                       # (H, W*Cin)

    # ---- bilinear x2 (align_corners=True) fused with conv (3x3 'same', Cin -> Cout) ----
    # out = sum_k (Uh_k @ y1) @ (Mw @ A2_k): the upsampled image never materializes.
    acc = jnp.dot(jnp.dot(uh_ref[0], y1, preferred_element_type=f32),
                  bw_ref[0], preferred_element_type=f32)
    acc = acc + jnp.dot(jnp.dot(uh_ref[1], y1, preferred_element_type=f32),
                        bw_ref[1], preferred_element_type=f32)
    acc = acc + jnp.dot(jnp.dot(uh_ref[2], y1, preferred_element_type=f32),
                        bw_ref[2], preferred_element_type=f32)
    o_ref[0] = _mish(acc + b2_ref[...])                                # (Ho, Wo*Cout)


# ---------------------------------------------------------------------------
# Wrapper-side (per-layer constant) operator matrices
# ---------------------------------------------------------------------------
def _conv_band_mats(w_oihw, width):
    """3x3 'same' conv as 3 tap-row matmul matrices on (rows, width*Cin) slabs.

    Returns (3, width*Cin, width*Cout): block-tridiagonal bands with the kw taps and
    the zero padding along the width axis folded in.
    """
    wk = jnp.transpose(w_oihw, (2, 3, 1, 0)).astype(jnp.float32)       # (3,3,Cin,Cout)
    cin, cout = wk.shape[2], wk.shape[3]
    mats = []
    for kh in range(3):
        a = jnp.zeros((width * cin, width * cout), jnp.float32)
        for kw in range(3):
            a = a + jnp.kron(jnp.eye(width, k=1 - kw, dtype=jnp.float32), wk[kh, kw])
        mats.append(a)
    return jnp.stack(mats)


def _interp_matrix(n_in, n_out):
    """nn.UpsamplingBilinear2d (align_corners=True) 1-D interpolation matrix (n_out, n_in)."""
    s = jnp.arange(n_out, dtype=jnp.float32) * (n_in - 1) / (n_out - 1)
    i0 = jnp.floor(s).astype(jnp.int32)
    i1 = jnp.minimum(i0 + 1, n_in - 1)
    f = s - i0.astype(jnp.float32)
    return ((1.0 - f)[:, None] * jax.nn.one_hot(i0, n_in, dtype=jnp.float32)
            + f[:, None] * jax.nn.one_hot(i1, n_in, dtype=jnp.float32))


def ps_upsample_conv_forward(x_nchw, params):
    """PSUpsampleConv forward. x: NCHW, weights in PyTorch OIHW layout."""
    N, Cin, H, W = x_nchw.shape
    Cout = params["conv_w"].shape[0]
    Ho, Wo = 2 * H, 2 * W
    hi = lax.Precision.HIGHEST  # keep wrapper-side weight prep at full f32 accuracy

    # Constant (per-layer) operator matrices, built once outside the kernel.
    a1 = _conv_band_mats(params["pre_w"], W)                           # (3, W*Cin, W*Cin)
    a2 = _conv_band_mats(params["conv_w"], Wo)                         # (3, Wo*Cin, Wo*Cout)
    uh = _interp_matrix(H, Ho)                                         # (Ho, H)
    uw = _interp_matrix(W, Wo)                                         # (Wo, W)
    mw = jnp.kron(uw.T, jnp.eye(Cin, dtype=jnp.float32))               # (W*Cin, Wo*Cin)
    # upsample -> conv2 is linear -> linear: fold the column interp into conv2's bands.
    bw = jnp.matmul(mw, a2, precision=hi)                              # (3, W*Cin, Wo*Cout)
    # conv2's 'same' padding along H: pre-shift the row-interp matrix per tap row.
    z = jnp.zeros((1, H), jnp.float32)
    uh3 = jnp.stack([jnp.concatenate([z, uh[:-1]], axis=0),            # tap kh=0 -> row h-1
                     uh,                                               # tap kh=1 -> row h
                     jnp.concatenate([uh[1:], z], axis=0)])            # tap kh=2 -> row h+1
    b1t = jnp.tile(params["pre_b"].astype(jnp.float32), (W,)).reshape(1, W * Cin)
    b2t = jnp.tile(params["conv_b"].astype(jnp.float32), (Wo,)).reshape(1, Wo * Cout)

    # Activations: NCHW -> lane-flattened (N, H, W*Cin) slabs.
    x2 = jnp.transpose(x_nchw.astype(jnp.float32), (0, 2, 3, 1)).reshape(N, H, W * Cin)

    # TODO(synk): pixel_shuffle=True / batchnorm=True branches not implemented (module defaults are False).
    # TODO(synk): for large H/W, tile the grid over output rows with a row halo instead of
    #             one whole image per grid step (the band matrices grow ~W^2).
    out = pl.pallas_call(
        _fused_kernel,
        out_shape=jax.ShapeDtypeStruct((N, Ho, Wo * Cout), jnp.float32),
        grid=(N,),
        in_specs=[
            pl.BlockSpec((1, H, W * Cin), lambda n: (n, 0, 0)),
            pl.BlockSpec((3, W * Cin, W * Cin), lambda n: (0, 0, 0)),
            pl.BlockSpec((1, W * Cin), lambda n: (0, 0)),
            pl.BlockSpec((3, Ho, H), lambda n: (0, 0, 0)),
            pl.BlockSpec((3, W * Cin, Wo * Cout), lambda n: (0, 0, 0)),
            pl.BlockSpec((1, Wo * Cout), lambda n: (0, 0)),
        ],
        out_specs=pl.BlockSpec((1, Ho, Wo * Cout), lambda n: (n, 0, 0)),
        compiler_params=pltpu.CompilerParams(
            dimension_semantics=("parallel",),
            vmem_limit_bytes=32 * 1024 * 1024,
        ),
    )(x2, a1, b1t, uh3, bw, b2t)

    # (N, Ho, Wo*Cout) -> (N, Cout, Ho, Wo)
    return jnp.transpose(out.reshape(N, Ho, Wo, Cout), (0, 3, 1, 2))


# ---------------------------------------------------------------------------
# Pure-JAX reference for correctness check
# ---------------------------------------------------------------------------
def _ref_forward(x_nchw, params):
    def conv(x, w, b):
        y = lax.conv_general_dilated(
            x, w, window_strides=(1, 1), padding=((1, 1), (1, 1)),
            dimension_numbers=("NCHW", "OIHW", "NCHW"),
            precision=lax.Precision.HIGHEST)
        return y + b.reshape(1, -1, 1, 1)

    def mish(x):
        return x * jnp.tanh(jnp.log1p(jnp.exp(x)))

    def up2x(x):
        N, C, H, W = x.shape
        Ho, Wo = 2 * H, 2 * W
        sh = jnp.arange(Ho, dtype=jnp.float32) * (H - 1) / (Ho - 1)
        sw = jnp.arange(Wo, dtype=jnp.float32) * (W - 1) / (Wo - 1)
        h0 = jnp.floor(sh).astype(jnp.int32); h1 = jnp.minimum(h0 + 1, H - 1)
        w0 = jnp.floor(sw).astype(jnp.int32); w1 = jnp.minimum(w0 + 1, W - 1)
        fh = (sh - h0).reshape(1, 1, Ho, 1)
        fw = (sw - w0).reshape(1, 1, 1, Wo)
        r0 = x[:, :, h0, :]; r1 = x[:, :, h1, :]
        a = r0[:, :, :, w0] * (1 - fw) + r0[:, :, :, w1] * fw
        b = r1[:, :, :, w0] * (1 - fw) + r1[:, :, :, w1] * fw
        return a * (1 - fh) + b * fh

    x = mish(conv(x_nchw, params["pre_w"], params["pre_b"]))
    x = up2x(x)
    x = mish(conv(x, params["conv_w"], params["conv_b"]))
    return x


if __name__ == "__main__":
    N, Cin, Cout, H, W = 2, 4, 8, 16, 16
    key = jax.random.PRNGKey(0)
    kx, k1, k2, k3, k4 = jax.random.split(key, 5)
    x = jax.random.normal(kx, (N, Cin, H, W), jnp.float32)
    params = {
        "pre_w": jax.random.normal(k1, (Cin, Cin, 3, 3), jnp.float32) * 0.1,
        "pre_b": jax.random.normal(k2, (Cin,), jnp.float32) * 0.1,
        "conv_w": jax.random.normal(k3, (Cout, Cin, 3, 3), jnp.float32) * 0.1,
        "conv_b": jax.random.normal(k4, (Cout,), jnp.float32) * 0.1,
    }

    out = jax.jit(ps_upsample_conv_forward)(x, params)
    out = jax.block_until_ready(out)

    ref = _ref_forward(x, params)
    assert out.shape == (N, Cout, 2 * H, 2 * W), out.shape
    err = float(jnp.max(jnp.abs(out - ref)))
    assert jnp.allclose(out, ref, atol=1e-4, rtol=1e-4), err
    print("KERNEL_OK")
</pallas_src>

<mosaic_0001>
module attributes {stable_mosaic.version = 11 : i64} {
  func.func @_fused_kernel(%arg0: i32, %arg1: memref<1x16x64xf32, #tpu.memory_space<vmem>>, %arg2: memref<3x64x64xf32, #tpu.memory_space<vmem>>, %arg3: memref<1x64xf32, #tpu.memory_space<vmem>>, %arg4: memref<3x32x16xf32, #tpu.memory_space<vmem>>, %arg5: memref<3x64x256xf32, #tpu.memory_space<vmem>>, %arg6: memref<1x256xf32, #tpu.memory_space<vmem>>, %arg7: memref<1x32x256xf32, #tpu.memory_space<vmem>>) attributes {dimension_semantics = [#tpu.dimension_semantics<parallel>], iteration_bounds = array<i64: 2>, scalar_prefetch = 0 : i64, scratch_operands = 0 : i64, tpu.core_type = #tpu.core_type<tc>, window_params = [{transform_indices = @transform_0, window_bounds = array<i64: 1, 16, 64>}, {pipeline_mode = #tpu.pipeline_mode<synchronous>, transform_indices = @transform_1, window_bounds = array<i64: 3, 64, 64>}, {pipeline_mode = #tpu.pipeline_mode<synchronous>, transform_indices = @transform_2, window_bounds = array<i64: 1, 64>}, {pipeline_mode = #tpu.pipeline_mode<synchronous>, transform_indices = @transform_3, window_bounds = array<i64: 3, 32, 16>}, {pipeline_mode = #tpu.pipeline_mode<synchronous>, transform_indices = @transform_4, window_bounds = array<i64: 3, 64, 256>}, {pipeline_mode = #tpu.pipeline_mode<synchronous>, transform_indices = @transform_5, window_bounds = array<i64: 1, 256>}, {transform_indices = @transform_6, window_bounds = array<i64: 1, 32, 256>}]} {
    %c0 = arith.constant 0 : index
    %c0_0 = arith.constant 0 : index
    %c0_1 = arith.constant 0 : index
    %0 = vector.load %arg1[%c0, %c0_0, %c0_1] : memref<1x16x64xf32, #tpu.memory_space<vmem>>, vector<1x16x64xf32>
    %1 = vector.shape_cast %0 : vector<1x16x64xf32> to vector<16x64xf32>
    %c0_2 = arith.constant 0 : index
    %c0_3 = arith.constant 0 : index
    %c0_4 = arith.constant 0 : index
    %2 = vector.load %arg2[%c0_2, %c0_3, %c0_4] : memref<3x64x64xf32, #tpu.memory_space<vmem>>, vector<1x64x64xf32>
    %3 = vector.shape_cast %2 : vector<1x64x64xf32> to vector<64x64xf32>
    %cst = arith.constant dense<0.000000e+00> : vector<16x64xf32>
    %4 = tpu.matmul %1, %3, %cst {dimension_numbers = #tpu.dot_dimension_numbers<[1], [0], [0], [1], [0, 0, 1, 1], [], []>} : vector<16x64xf32>, vector<64x64xf32>, vector<16x64xf32> -> vector<16x64xf32>
    %c1 = arith.constant 1 : index
    %c0_5 = arith.constant 0 : index
    %c0_6 = arith.constant 0 : index
    %5 = vector.load %arg2[%c1, %c0_5, %c0_6] : memref<3x64x64xf32, #tpu.memory_space<vmem>>, vector<1x64x64xf32>
    %6 = vector.shape_cast %5 : vector<1x64x64xf32> to vector<64x64xf32>
    %cst_7 = arith.constant dense<0.000000e+00> : vector<16x64xf32>
    %7 = tpu.matmul %1, %6, %cst_7 {dimension_numbers = #tpu.dot_dimension_numbers<[1], [0], [0], [1], [0, 0, 1, 1], [], []>} : vector<16x64xf32>, vector<64x64xf32>, vector<16x64xf32> -> vector<16x64xf32>
    %c2 = arith.constant 2 : index
    %c0_8 = arith.constant 0 : index
    %c0_9 = arith.constant 0 : index
    %8 = vector.load %arg2[%c2, %c0_8, %c0_9] : memref<3x64x64xf32, #tpu.memory_space<vmem>>, vector<1x64x64xf32>
    %9 = vector.shape_cast %8 : vector<1x64x64xf32> to vector<64x64xf32>
    %cst_10 = arith.constant dense<0.000000e+00> : vector<16x64xf32>
    %10 = tpu.matmul %1, %9, %cst_10 {dimension_numbers = #tpu.dot_dimension_numbers<[1], [0], [0], [1], [0, 0, 1, 1], [], []>} : vector<16x64xf32>, vector<64x64xf32>, vector<16x64xf32> -> vector<16x64xf32>
    %11 = tpu.iota {dimensions = array<i32: 0>} : vector<16x16xi32>
    %12 = tpu.iota {dimensions = array<i32: 1>} : vector<16x16xi32>
    %c1_i32 = arith.constant 1 : i32
    %13 = vector.broadcast %c1_i32 : i32 to vector<16x16xi32>
    %14 = arith.addi %12, %13 : vector<16x16xi32>
    %15 = arith.cmpi eq, %11, %14 : vector<16x16xi32>
    %16 = arith.extui %15 : vector<16x16xi1> to vector<16x16xi32>
    %17 = arith.sitofp %16 : vector<16x16xi32> to vector<16x16xf32>
    %c1_i32_11 = arith.constant 1 : i32
    %18 = vector.broadcast %c1_i32_11 : i32 to vector<16x16xi32>
    %19 = arith.addi %11, %18 : vector<16x16xi32>
    %20 = arith.cmpi eq, %19, %12 : vector<16x16xi32>
    %21 = arith.extui %20 : vector<16x16xi1> to vector<16x16xi32>
    %22 = arith.sitofp %21 : vector<16x16xi32> to vector<16x16xf32>
    %cst_12 = arith.constant dense<0.000000e+00> : vector<16x64xf32>
    %23 = tpu.matmul %17, %4, %cst_12 {dimension_numbers = #tpu.dot_dimension_numbers<[1], [0], [0], [1], [0, 0, 1, 1], [], []>} : vector<16x16xf32>, vector<16x64xf32>, vector<16x64xf32> -> vector<16x64xf32>
    %24 = arith.addf %7, %23 : vector<16x64xf32>
    %cst_13 = arith.constant dense<0.000000e+00> : vector<16x64xf32>
    %25 = tpu.matmul %22, %10, %cst_13 {dimension_numbers = #tpu.dot_dimension_numbers<[1], [0], [0], [1], [0, 0, 1, 1], [], []>} : vector<16x16xf32>, vector<16x64xf32>, vector<16x64xf32> -> vector<16x64xf32>
    %26 = arith.addf %24, %25 : vector<16x64xf32>
    %c0_14 = arith.constant 0 : index
    %c0_15 = arith.constant 0 : index
    %27 = vector.load %arg3[%c0_14, %c0_15] : memref<1x64xf32, #tpu.memory_space<vmem>>, vector<1x64xf32>
    %28 = vector.broadcast %27 : vector<1x64xf32> to vector<16x64xf32>
    %29 = arith.addf %26, %28 : vector<16x64xf32>
    %cst_16 = arith.constant 2.000000e+01 : f32
    %30 = vector.broadcast %cst_16 : f32 to vector<16x64xf32>
    %31 = arith.minimumf %29, %30 : vector<16x64xf32>
    %32 = math.exp %31 : vector<16x64xf32>
    %cst_17 = arith.constant 2.000000e+00 : f32
    %33 = vector.broadcast %cst_17 : f32 to vector<16x64xf32>
    %34 = arith.addf %32, %33 : vector<16x64xf32>
    %35 = arith.mulf %32, %34 : vector<16x64xf32>
    %36 = arith.mulf %29, %35 : vector<16x64xf32>
    %cst_18 = arith.constant 2.000000e+00 : f32
    %37 = vector.broadcast %cst_18 : f32 to vector<16x64xf32>
    %38 = arith.addf %35, %37 : vector<16x64xf32>
    %39 = tpu.reciprocal %38 : vector<16x64xf32> -> vector<16x64xf32>
    %40 = arith.mulf %36, %39 : vector<16x64xf32>
    %c0_19 = arith.constant 0 : index
    %c0_20 = arith.constant 0 : index
    %c0_21 = arith.constant 0 : index
    %41 = vector.load %arg4[%c0_19, %c0_20, %c0_21] : memref<3x32x16xf32, #tpu.memory_space<vmem>>, vector<1x32x16xf32>
    %42 = vector.shape_cast %41 : vector<1x32x16xf32> to vector<32x16xf32>
    %cst_22 = arith.constant dense<0.000000e+00> : vector<32x64xf32>
    %43 = tpu.matmul %42, %40, %cst_22 {dimension_numbers = #tpu.dot_dimension_numbers<[1], [0], [0], [1], [0, 0, 1, 1], [], []>} : vector<32x16xf32>, vector<16x64xf32>, vector<32x64xf32> -> vector<32x64xf32>
    %c0_23 = arith.constant 0 : index
    %c0_24 = arith.constant 0 : index
    %c0_25 = arith.constant 0 : index
    %44 = vector.load %arg5[%c0_23, %c0_24, %c0_25] : memref<3x64x256xf32, #tpu.memory_space<vmem>>, vector<1x64x256xf32>
    %45 = vector.shape_cast %44 : vector<1x64x256xf32> to vector<64x256xf32>
    %cst_26 = arith.constant dense<0.000000e+00> : vector<32x256xf32>
    %46 = tpu.matmul %43, %45, %cst_26 {dimension_numbers = #tpu.dot_dimension_numbers<[1], [0], [0], [1], [0, 0, 1, 1], [], []>} : vector<32x64xf32>, vector<64x256xf32>, vector<32x256xf32> -> vector<32x256xf32>
    %c1_27 = arith.constant 1 : index
    %c0_28 = arith.constant 0 : index
    %c0_29 = arith.constant 0 : index
    %47 = vector.load %arg4[%c1_27, %c0_28, %c0_29] : memref<3x32x16xf32, #tpu.memory_space<vmem>>, vector<1x32x16xf32>
    %48 = vector.shape_cast %47 : vector<1x32x16xf32> to vector<32x16xf32>
    %cst_30 = arith.constant dense<0.000000e+00> : vector<32x64xf32>
    %49 = tpu.matmul %48, %40, %cst_30 {dimension_numbers = #tpu.dot_dimension_numbers<[1], [0], [0], [1], [0, 0, 1, 1], [], []>} : vector<32x16xf32>, vector<16x64xf32>, vector<32x64xf32> -> vector<32x64xf32>
    %c1_31 = arith.constant 1 : index
    %c0_32 = arith.constant 0 : index
    %c0_33 = arith.constant 0 : index
    %50 = vector.load %arg5[%c1_31, %c0_32, %c0_33] : memref<3x64x256xf32, #tpu.memory_space<vmem>>, vector<1x64x256xf32>
    %51 = vector.shape_cast %50 : vector<1x64x256xf32> to vector<64x256xf32>
    %cst_34 = arith.constant dense<0.000000e+00> : vector<32x256xf32>
    %52 = tpu.matmul %49, %51, %cst_34 {dimension_numbers = #tpu.dot_dimension_numbers<[1], [0], [0], [1], [0, 0, 1, 1], [], []>} : vector<32x64xf32>, vector<64x256xf32>, vector<32x256xf32> -> vector<32x256xf32>
    %53 = arith.addf %46, %52 : vector<32x256xf32>
    %c2_35 = arith.constant 2 : index
    %c0_36 = arith.constant 0 : index
    %c0_37 = arith.constant 0 : index
    %54 = vector.load %arg4[%c2_35, %c0_36, %c0_37] : memref<3x32x16xf32, #tpu.memory_space<vmem>>, vector<1x32x16xf32>
    %55 = vector.shape_cast %54 : vector<1x32x16xf32> to vector<32x16xf32>
    %cst_38 = arith.constant dense<0.000000e+00> : vector<32x64xf32>
    %56 = tpu.matmul %55, %40, %cst_38 {dimension_numbers = #tpu.dot_dimension_numbers<[1], [0], [0], [1], [0, 0, 1, 1], [], []>} : vector<32x16xf32>, vector<16x64xf32>, vector<32x64xf32> -> vector<32x64xf32>
    %c2_39 = arith.constant 2 : index
    %c0_40 = arith.constant 0 : index
    %c0_41 = arith.constant 0 : index
    %57 = vector.load %arg5[%c2_39, %c0_40, %c0_41] : memref<3x64x256xf32, #tpu.memory_space<vmem>>, vector<1x64x256xf32>
    %58 = vector.shape_cast %57 : vector<1x64x256xf32> to vector<64x256xf32>
    %cst_42 = arith.constant dense<0.000000e+00> : vector<32x256xf32>
    %59 = tpu.matmul %56, %58, %cst_42 {dimension_numbers = #tpu.dot_dimension_numbers<[1], [0], [0], [1], [0, 0, 1, 1], [], []>} : vector<32x64xf32>, vector<64x256xf32>, vector<32x256xf32> -> vector<32x256xf32>
    %60 = arith.addf %53, %59 : vector<32x256xf32>
    %c0_43 = arith.constant 0 : index
    %c0_44 = arith.constant 0 : index
    %61 = vector.load %arg6[%c0_43, %c0_44] : memref<1x256xf32, #tpu.memory_space<vmem>>, vector<1x256xf32>
    %62 = vector.broadcast %61 : vector<1x256xf32> to vector<32x256xf32>
    %63 = arith.addf %60, %62 : vector<32x256xf32>
    %cst_45 = arith.constant 2.000000e+01 : f32
    %64 = vector.broadcast %cst_45 : f32 to vector<32x256xf32>
    %65 = arith.minimumf %63, %64 : vector<32x256xf32>
    %66 = math.exp %65 : vector<32x256xf32>
    %cst_46 = arith.constant 2.000000e+00 : f32
    %67 = vector.broadcast %cst_46 : f32 to vector<32x256xf32>
    %68 = arith.addf %66, %67 : vector<32x256xf32>
    %69 = arith.mulf %66, %68 : vector<32x256xf32>
    %70 = arith.mulf %63, %69 : vector<32x256xf32>
    %cst_47 = arith.constant 2.000000e+00 : f32
    %71 = vector.broadcast %cst_47 : f32 to vector<32x256xf32>
    %72 = arith.addf %69, %71 : vector<32x256xf32>
    %73 = tpu.reciprocal %72 : vector<32x256xf32> -> vector<32x256xf32>
    %74 = arith.mulf %70, %73 : vector<32x256xf32>
    %c0_48 = arith.constant 0 : index
    %c0_49 = arith.constant 0 : index
    %c0_50 = arith.constant 0 : index
    %75 = vector.load %arg7[%c0_48, %c0_49, %c0_50] : memref<1x32x256xf32, #tpu.memory_space<vmem>>, vector<1x32x256xf32>
    %76 = vector.shape_cast %75 : vector<1x32x256xf32> to vector<32x256xf32>
    %77 = vector.shape_cast %74 : vector<32x256xf32> to vector<1x32x256xf32>
    tpu.vector_store %arg7[%c0_48, %c0_49, %c0_50], %77 {strides = array<i32>} : memref<1x32x256xf32, #tpu.memory_space<vmem>>, vector<1x32x256xf32>,
    return
  }
  func.func @transform_0(%arg0: i32) -> (i32, i32, i32) {
    %c0_i32 = arith.constant 0 : i32
    %c0_i32_0 = arith.constant 0 : i32
    %c0_i32_1 = arith.constant 0 : i32
    return %arg0, %c0_i32, %c0_i32_0 : i32, i32, i32
  }
  func.func @transform_1(%arg0: i32) -> (i32, i32, i32) {
    %c0_i32 = arith.constant 0 : i32
    %c0_i32_0 = arith.constant 0 : i32
    %c0_i32_1 = arith.constant 0 : i32
    %c0_i32_2 = arith.constant 0 : i32
    return %c0_i32, %c0_i32_0, %c0_i32_1 : i32, i32, i32
  }
  func.func @transform_2(%arg0: i32) -> (i32, i32) {
    %c0_i32 = arith.constant 0 : i32
    %c0_i32_0 = arith.constant 0 : i32
    %c0_i32_1 = arith.constant 0 : i32
    return %c0_i32, %c0_i32_0 : i32, i32
  }
  func.func @transform_3(%arg0: i32) -> (i32, i32, i32) {
    %c0_i32 = arith.constant 0 : i32
    %c0_i32_0 = arith.constant 0 : i32
    %c0_i32_1 = arith.constant 0 : i32
    %c0_i32_2 = arith.constant 0 : i32
    return %c0_i32, %c0_i32_0, %c0_i32_1 : i32, i32, i32
  }
  func.func @transform_4(%arg0: i32) -> (i32, i32, i32) {
    %c0_i32 = arith.constant 0 : i32
    %c0_i32_0 = arith.constant 0 : i32
    %c0_i32_1 = arith.constant 0 : i32
    %c0_i32_2 = arith.constant 0 : i32
    return %c0_i32, %c0_i32_0, %c0_i32_1 : i32, i32, i32
  }
  func.func @transform_5(%arg0: i32) -> (i32, i32) {
    %c0_i32 = arith.constant 0 : i32
    %c0_i32_0 = arith.constant 0 : i32
    %c0_i32_1 = arith.constant 0 : i32
    return %c0_i32, %c0_i32_0 : i32, i32
  }
  func.func @transform_6(%arg0: i32) -> (i32, i32, i32) {
    %c0_i32 = arith.constant 0 : i32
    %c0_i32_0 = arith.constant 0 : i32
    %c0_i32_1 = arith.constant 0 : i32
    return %arg0, %c0_i32, %c0_i32_0 : i32, i32, i32
  }
}

</mosaic_0001>

<llo_original>
// kernel: tile.18
$region0: #{tile.18}
  #allocation0 [shape = 's32[1]{0}', space=sflag, size = 0x4, scoped, tag = 'scoped memory for tile.18']
  %s0 = inlined_call_operand.vmem [shape: f32[8], index: 0, kind: input, shape index: {}]
  %s1 = inlined_call_operand.vmem [shape: f32[32,8], index: 1, kind: output, shape index: {}]
  // Predicated region
  $region2: #{tile.18} parent=0 // pred_check
    _
  $region3: #{tile.18} parent=0 // pred_check_branch
    %3 = sbr.rel (0) target = $region5
  $region4: #{tile.18} parent=0 // pred_region
    _
  $region5: #{tile.18} parent=0 // pred_fallthru
    _
  %v4 = vld [vmem:[%s0] ss:$0 sm:$0xff]
  %5 = vst [vmem:[%s1] sm:$0xff] %v4
  %s6 = scalar_lea.vmem %s1, 8
  %7 = vst [vmem:[%s6] sm:$0xff] %v4
  %s8 = scalar_lea.vmem %s1, 16
  %9 = vst [vmem:[%s8] sm:$0xff] %v4
  %s10 = scalar_lea.vmem %s1, 24
  %11 = vst [vmem:[%s10] sm:$0xff] %v4

// kernel: tile.19
$region0: #{tile.19}
  %s0 = inlined_call_operand.vmem [shape: f32[32,8], index: 0, kind: input, shape index: {}]
  %s1 = inlined_call_operand.vmem [shape: f32[1,256], index: 1, kind: output, shape index: {}]
  $region1: #{tile.19} parent=0
    #allocation0 [shape = 'u8[8192]{0}', space=vmem, size = 0x2000, scoped, tag = 'scoped mem for output reshape']
    %s2 = smov 3
    %v3 = vld [vmem:[%s0] ss:$16 sm:%s2]
    %vm4 = vcmask 64512
    %5 = vst.msk [vmem:[#allocation0] ss:$8 sm:$0x3] %vm4, %v3
    %s6 = scalar_lea.vmem %s0, 15
    %s7 = smov 3
    %v8 = vld [vmem:[%s6] ss:$16 sm:%s7]
    %9 = vrot.lane.b32.xlu0 %v8, 120
    %v10 = vpop.permute.xlu0 %9
    %vm11 = vcmask 1048512
    %12 = vst.msk [vmem:[#allocation0] ss:$8 sm:$0x3] %vm11, %v10
    %s13 = scalar_lea.vmem %s0, 14
    %s14 = smov 3
    %v15 = vld [vmem:[%s13] ss:$16 sm:%s14]
    %16 = vrot.lane.b32.xlu0 %v15, 112
    %v17 = vpop.permute.xlu0 %16
    %vm18 = vcmask 982912
    %19 = vst.msk [vmem:[#allocation0] ss:$8 sm:$0x3] %vm18, %v17
    %s20 = scalar_lea.vmem %s0, 13
    %s21 = smov 3
    %v22 = vld [vmem:[%s20] ss:$16 sm:%s21]
    %23 = vrot.lane.b32.xlu0 %v22, 104
    %v24 = vpop.permute.xlu0 %23
    %vm25 = vcmask 917312
    %26 = vst.msk [vmem:[#allocation0] ss:$8 sm:$0x3] %vm25, %v24
    %s27 = scalar_lea.vmem %s0, 12
    %s28 = smov 3
    %v29 = vld [vmem:[%s27] ss:$16 sm:%s28]
    %30 = vrot.lane.b32.xlu0 %v29, 96
    %v31 = vpop.permute.xlu0 %30
    %vm32 = vcmask 851712
    %33 = vst.msk [vmem:[#allocation0] ss:$8 sm:$0x3] %vm32, %v31
    %s34 = scalar_lea.vmem %s0, 11
    %s35 = smov 3
    %v36 = vld [vmem:[%s34] ss:$16 sm:%s35]
    %37 = vrot.lane.b32.xlu0 %v36, 88
    %v38 = vpop.permute.xlu0 %37
    %vm39 = vcmask 786112
    %40 = vst.msk [vmem:[#allocation0] ss:$8 sm:$0x3] %vm39, %v38
    %s41 = scalar_lea.vmem %s0, 10
    %s42 = smov 3
    %v43 = vld [vmem:[%s41] ss:$16 sm:%s42]
    %44 = vrot.lane.b32.xlu0 %v43, 80
    %v45 = vpop.permute.xlu0 %44
    %vm46 = vcmask 720512
    %47 = vst.msk [vmem:[#allocation0] ss:$8 sm:$0x3] %vm46, %v45
    %s48 = scalar_lea.vmem %s0, 9
    %s49 = smov 3
    %v50 = vld [vmem:[%s48] ss:$16 sm:%s49]
    %51 = vrot.lane.b32.xlu0 %v50, 72
    %v52 = vpop.permute.xlu0 %51
    %vm53 = vcmask 654912
    %54 = vst.msk [vmem:[#allocation0] ss:$8 sm:$0x3] %vm53, %v52
    %s55 = scalar_lea.vmem %s0, 8
    %s56 = smov 3
    %v57 = vld [vmem:[%s55] ss:$16 sm:%s56]
    %58 = vrot.lane.b32.xlu0 %v57, 64
    %v59 = vpop.permute.xlu0 %58
    %vm60 = vcmask 589312
    %61 = vst.msk [vmem:[#allocation0] ss:$8 sm:$0x3] %vm60, %v59
    %s62 = scalar_lea.vmem %s0, 7
    %s63 = smov 3
    %v64 = vld [vmem:[%s62] ss:$16 sm:%s63]
    %65 = vrot.lane.b32.xlu0 %v64, 56
    %v66 = vpop.permute.xlu0 %65
    %vm67 = vcmask 523712
    %68 = vst.msk [vmem:[#allocation0] ss:$8 sm:$0x3] %vm67, %v66
    %s69 = scalar_lea.vmem %s0, 6
    %s70 = smov 3
    %v71 = vld [vmem:[%s69] ss:$16 sm:%s70]
    %72 = vrot.lane.b32.xlu0 %v71, 48
    %v73 = vpop.permute.xlu0 %72
    %vm74 = vcmask 458112
    %75 = vst.msk [vmem:[#allocation0] ss:$8 sm:$0x3] %vm74, %v73
    %s76 = scalar_lea.vmem %s0, 5
    %s77 = smov 3
    %v78 = vld [vmem:[%s76] ss:$16 sm:%s77]
    %79 = vrot.lane.b32.xlu0 %v78, 40
    %v80 = vpop.permute.xlu0 %79
    %vm81 = vcmask 392512
    %82 = vst.msk [vmem:[#allocation0] ss:$8 sm:$0x3] %vm81, %v80
    %s83 = scalar_lea.vmem %s0, 4
    %s84 = smov 3
    %v85 = vld [vmem:[%s83] ss:$16 sm:%s84]
    %86 = vrot.lane.b32.xlu0 %v85, 32
    %v87 = vpop.permute.xlu0 %86
    %vm88 = vcmask 326912
    %89 = vst.msk [vmem:[#allocation0] ss:$8 sm:$0x3] %vm88, %v87
    %s90 = scalar_lea.vmem %s0, 3
    %s91 = smov 3
    %v92 = vld [vmem:[%s90] ss:$16 sm:%s91]
    %93 = vrot.lane.b32.xlu0 %v92, 24
    %v94 = vpop.permute.xlu0 %93
    %vm95 = vcmask 261312
    %96 = vst.msk [vmem:[#allocation0] ss:$8 sm:$0x3] %vm95, %v94
    %s97 = scalar_lea.vmem %s0, 2
    %s98 = smov 3
    %v99 = vld [vmem:[%s97] ss:$16 sm:%s98]
    %100 = vrot.lane.b32.xlu0 %v99, 16
    %v101 = vpop.permute.xlu0 %100
    %vm102 = vcmask 195712
    %103 = vst.msk [vmem:[#allocation0] ss:$8 sm:$0x3] %vm102, %v101
    %s104 = scalar_lea.vmem %s0, 1
    %s105 = smov 3
    %v106 = vld [vmem:[%s104] ss:$16 sm:%s105]
    %107 = vrot.lane.b32.xlu0 %v106, 8
    %v108 = vpop.permute.xlu0 %107
    %vm109 = vcmask 130112
    %110 = vst.msk [vmem:[#allocation0] ss:$8 sm:$0x3] %vm109, %v108
    %s112 = sshll.u32 1, 1
    %s113 = ssub.s32 %s112, 1
    %v115 = vld [vmem:[#allocation0] sm:%s113]
    %s116 = sshll.u32 1, 1
    %s117 = ssub.s32 %s116, 1
    %118 = vst [vmem:[%s1] sm:%s117] %v115
    %s119 = scalar_lea.vmem [#allocation0], 8
    %v120 = vld [vmem:[%s119] sm:%s113]
    %s121 = sshll.u32 1, 1
    %s122 = ssub.s32 %s121, 1
    %s123 = scalar_lea.vmem %s1, 1
    %124 = vst [vmem:[%s123] sm:%s122] %v120

// kernel: tile.13
$region0: #{tile.13}
  #allocation0 [shape = 's32[1]{0}', space=sflag, size = 0x4, scoped, tag = 'scoped memory for tile.13']
  %s0 = inlined_call_operand.vmem [shape: f32[4], index: 0, kind: input, shape index: {}]
  %s1 = inlined_call_operand.vmem [shape: f32[16,4], index: 1, kind: output, shape index: {}]
  // Predicated region
  $region2: #{tile.13} parent=0 // pred_check
    _
  $region3: #{tile.13} parent=0 // pred_check_branch
    %3 = sbr.rel (0) target = $region5
  $region4: #{tile.13} parent=0 // pred_region
    _
  $region5: #{tile.13} parent=0 // pred_fallthru
    _
  %v4 = vld [vmem:[%s0] ss:$0 sm:$0xff]
  %5 = vst [vmem:[%s1] sm:$0xff] %v4
  %s6 = scalar_lea.vmem %s1, 8
  %7 = vst [vmem:[%s6] sm:$0xff] %v4

// kernel: tile.14
$region0: #{tile.14}
  %s0 = inlined_call_operand.vmem [shape: f32[16,4], index: 0, kind: input, shape index: {}]
  %s1 = inlined_call_operand.vmem [shape: f32[1,64], index: 1, kind: output, shape index: {}]
  $region1: #{tile.14} parent=0
    #allocation0 [shape = 'u8[4096]{0}', space=vmem, size = 0x1000, scoped, tag = 'scoped mem for output reshape']
    %v2 = vld [vmem:[%s0] sm:$0x1]
    %vm3 = vcmask 31744
    %4 = vst.msk [vmem:[#allocation0] sm:$0x1] %vm3, %v2
    %s5 = scalar_lea.vmem %s0, 15
    %v6 = vld [vmem:[%s5] sm:$0x1]
    %7 = vrot.lane.b32.xlu0 %v6, 60
    %v8 = vpop.permute.xlu0 %7
    %vm9 = vcmask 523744
    %10 = vst.msk [vmem:[#allocation0] sm:$0x1] %vm9, %v8
    %s11 = scalar_lea.vmem %s0, 14
    %v12 = vld [vmem:[%s11] sm:$0x1]
    %13 = vrot.lane.b32.xlu0 %v12, 56
    %v14 = vpop.permute.xlu0 %13
    %vm15 = vcmask 490944
    %16 = vst.msk [vmem:[#allocation0] sm:$0x1] %vm15, %v14
    %s17 = scalar_lea.vmem %s0, 13
    %v18 = vld [vmem:[%s17] sm:$0x1]
    %19 = vrot.lane.b32.xlu0 %v18, 52
    %v20 = vpop.permute.xlu0 %19
    %vm21 = vcmask 458144
    %22 = vst.msk [vmem:[#allocation0] sm:$0x1] %vm21, %v20
    %s23 = scalar_lea.vmem %s0, 12
    %v24 = vld [vmem:[%s23] sm:$0x1]
    %25 = vrot.lane.b32.xlu0 %v24, 48
    %v26 = vpop.permute.xlu0 %25
    %vm27 = vcmask 425344
    %28 = vst.msk [vmem:[#allocation0] sm:$0x1] %vm27, %v26
    %s29 = scalar_lea.vmem %s0, 11
    %v30 = vld [vmem:[%s29] sm:$0x1]
    %31 = vrot.lane.b32.xlu0 %v30, 44
    %v32 = vpop.permute.xlu0 %31
    %vm33 = vcmask 392544
    %34 = vst.msk [vmem:[#allocation0] sm:$0x1] %vm33, %v32
    %s35 = scalar_lea.vmem %s0, 10
    %v36 = vld [vmem:[%s35] sm:$0x1]
    %37 = vrot.lane.b32.xlu0 %v36, 40
    %v38 = vpop.permute.xlu0 %37
    %vm39 = vcmask 359744
    %40 = vst.msk [vmem:[#allocation0] sm:$0x1] %vm39, %v38
    %s41 = scalar_lea.vmem %s0, 9
    %v42 = vld [vmem:[%s41] sm:$0x1]
    %43 = vrot.lane.b32.xlu0 %v42, 36
    %v44 = vpop.permute.xlu0 %43
    %vm45 = vcmask 326944
    %46 = vst.msk [vmem:[#allocation0] sm:$0x1] %vm45, %v44
    %s47 = scalar_lea.vmem %s0, 8
    %v48 = vld [vmem:[%s47] sm:$0x1]
    %49 = vrot.lane.b32.xlu0 %v48, 32
    %v50 = vpop.permute.xlu0 %49
    %vm51 = vcmask 294144
    %52 = vst.msk [vmem:[#allocation0] sm:$0x1] %vm51, %v50
    %s53 = scalar_lea.vmem %s0, 7
    %v54 = vld [vmem:[%s53] sm:$0x1]
    %55 = vrot.lane.b32.xlu0 %v54, 28
    %v56 = vpop.permute.xlu0 %55
    %vm57 = vcmask 261344
    %58 = vst.msk [vmem:[#allocation0] sm:$0x1] %vm57, %v56
    %s59 = scalar_lea.vmem %s0, 6
    %v60 = vld [vmem:[%s59] sm:$0x1]
    %61 = vrot.lane.b32.xlu0 %v60, 24
    %v62 = vpop.permute.xlu0 %61
    %vm63 = vcmask 228544
    %64 = vst.msk [vmem:[#allocation0] sm:$0x1] %vm63, %v62
    %s65 = scalar_lea.vmem %s0, 5
    %v66 = vld [vmem:[%s65] sm:$0x1]
    %67 = vrot.lane.b32.xlu0 %v66, 20
    %v68 = vpop.permute.xlu0 %67
    %vm69 = vcmask 195744
    %70 = vst.msk [vmem:[#allocation0] sm:$0x1] %vm69, %v68
    %s71 = scalar_lea.vmem %s0, 4
    %v72 = vld [vmem:[%s71] sm:$0x1]
    %73 = vrot.lane.b32.xlu0 %v72, 16
    %v74 = vpop.permute.xlu0 %73
    %vm75 = vcmask 162944
    %76 = vst.msk [vmem:[#allocation0] sm:$0x1] %vm75, %v74
    %s77 = scalar_lea.vmem %s0, 3
    %v78 = vld [vmem:[%s77] sm:$0x1]
    %79 = vrot.lane.b32.xlu0 %v78, 12
    %v80 = vpop.permute.xlu0 %79
    %vm81 = vcmask 130144
    %82 = vst.msk [vmem:[#allocation0] sm:$0x1] %vm81, %v80
    %s83 = scalar_lea.vmem %s0, 2
    %v84 = vld [vmem:[%s83] sm:$0x1]
    %85 = vrot.lane.b32.xlu0 %v84, 8
    %v86 = vpop.permute.xlu0 %85
    %vm87 = vcmask 97344
    %88 = vst.msk [vmem:[#allocation0] sm:$0x1] %vm87, %v86
    %s89 = scalar_lea.vmem %s0, 1
    %v90 = vld [vmem:[%s89] sm:$0x1]
    %91 = vrot.lane.b32.xlu0 %v90, 4
    %v92 = vpop.permute.xlu0 %91
    %vm93 = vcmask 64544
    %94 = vst.msk [vmem:[#allocation0] sm:$0x1] %vm93, %v92
    %s96 = sshll.u32 1, 1
    %s97 = ssub.s32 %s96, 1
    %v99 = vld [vmem:[#allocation0] sm:%s97]
    %s100 = sshll.u32 1, 1
    %s101 = ssub.s32 %s100, 1
    %102 = vst [vmem:[%s1] sm:%s101] %v99

// kernel: ps_upsample_conv_forward.1
$region0: #{ps_upsample_conv_forward.1}
  #allocation0 [shape = 'u32[]', space=smem, size = 0x4, offset = 0x4, fixed_abs, tag = 'smem constant byte address 0x4 - core index']
  #allocation1 [shape = 'u32[144,128]{1,0:T(1,128)}', space=vmem, size = 0x12000, scoped, tag = 'internal scratch']
  %s0 = inlined_call_operand.vmem [shape: f32[2,16,64], index: 0, kind: input, shape index: {}]
  %s1 = inlined_call_operand.vmem [shape: f32[3,64,64], index: 1, kind: input, shape index: {}]
  %s2 = inlined_call_operand.vmem [shape: f32[1,64], index: 2, kind: input, shape index: {}]
  %s3 = inlined_call_operand.vmem [shape: f32[3,32,16], index: 3, kind: input, shape index: {}]
  %s4 = inlined_call_operand.vmem [shape: f32[3,64,256], index: 4, kind: input, shape index: {}]
  %s5 = inlined_call_operand.vmem [shape: f32[1,256], index: 5, kind: input, shape index: {}]
  %s6 = inlined_call_operand.vmem [shape: f32[2,32,256], index: 6, kind: output, shape index: {}]
  %s7 = sld [smem:[#allocation0]]
  $region57: #{ps_upsample_conv_forward.1} parent=0
    _
  %s9 = ssub.s32 1, %s7
  %s10 = scalar_select 0, %s9, %s7
  loop: start=0, step=1, limit=4
  $region2: #{ps_upsample_conv_forward.1} parent=0 // loop_pre_header
    _
  $region3: #{ps_upsample_conv_forward.1} parent=0 // loop_header
    %s12 = sphi 0, %s16
    %p13 = scmp.ge.s32.totalorder %s12, 4
    %s22 = sphi 0, %s24
    %s25 = sphi 0, %s22
    %s26 = sphi 0, %s25
    %s42 = sphi 0, %s26
    %s46 = sphi 0, %s46
    %s48 = sphi 0, %s46
    %s49 = sphi 0, %s48
    %s63 = sphi 0, %s49
    %s67 = sphi 0, %s67
    %s69 = sphi 0, %s67
    %s70 = sphi 0, %s69
    %s84 = sphi 0, %s70
    %s88 = sphi 0, %s88
    %s90 = sphi 0, %s88
    %s91 = sphi 0, %s90
    %s105 = sphi 0, %s91
    %s109 = sphi 0, %s109
    %s111 = sphi 0, %s109
    %s112 = sphi 0, %s111
    %s126 = sphi 0, %s112
    %s130 = sphi 0, %s130
    %s132 = sphi 0, %s130
    %s133 = sphi 0, %s132
    %s147 = sphi 0, %s133
    %s153 = sphi 0, %s155
    %s156 = sphi 0, %s153
    %s157 = sphi 0, %s156
    %s173 = sphi 0, %s157
  $region4: #{ps_upsample_conv_forward.1} parent=0 // loop_header_branch
    %15 = sbr.rel (%p13) target = $region8
  $region5: #{ps_upsample_conv_forward.1} parent=0 // loop_body
    %s17 = ssub.s32 %s12, 1
    %s18 = ssub.s32 %s12, 2
    %s19 = sadd.s32 %s12, 1
    %s20 = ssub.s32 %s12, %s19
    %p21 = scmp.eq.s32.totalorder %s20, 0
    %s23 = sadd.s32 %s22, 1
    %s24 = scalar_select %p21, %s22, %s23
    %p27 = pneg %p21
    %p28 = scmp.eq.s32.totalorder %s12, 1
    %p29 = por %p27, %p28
    %p30 = scmp.ne.s32.totalorder %s22, %s25
    %p31 = scmp.eq.s32.totalorder %s12, 0
    %p32 = por %p30, %p31
    %p33 = scmp.ne.s32.totalorder %s22, %s25
    %p34 = scmp.eq.s32.totalorder %s17, 1
    %p35 = por %p33, %p34
    %p36 = scmp.ne.s32.totalorder %s25, %s26
    %p37 = scmp.eq.s32.totalorder %s17, 0
    %p38 = por %p36, %p37
    %p39 = scmp.ne.s32.totalorder %s25, %s26
    %p40 = scmp.eq.s32.totalorder %s18, 1
    %p41 = por %p39, %p40
    %p43 = scmp.ne.s32.totalorder %s26, %s42
    %p44 = scmp.eq.s32.totalorder %s18, 0
    %p45 = por %p43, %p44
    %s47 = sadd.s32 %s46, 1
    %p50 = scmp.eq.s32.totalorder %s12, 1
    %p51 = scmp.ne.s32.totalorder %s46, %s48
    %p52 = scmp.eq.s32.totalorder %s12, 0
    %p53 = por %p51, %p52
    %p54 = scmp.ne.s32.totalorder %s46, %s48
    %p55 = scmp.eq.s32.totalorder %s17, 1
    %p56 = por %p54, %p55
    %p57 = scmp.ne.s32.totalorder %s48, %s49
    %p58 = scmp.eq.s32.totalorder %s17, 0
    %p59 = por %p57, %p58
    %p60 = scmp.ne.s32.totalorder %s48, %s49
    %p61 = scmp.eq.s32.totalorder %s18, 1
    %p62 = por %p60, %p61
    %p64 = scmp.ne.s32.totalorder %s49, %s63
    %p65 = scmp.eq.s32.totalorder %s18, 0
    %p66 = por %p64, %p65
    %s68 = sadd.s32 %s67, 1
    %p71 = scmp.eq.s32.totalorder %s12, 1
    %p72 = scmp.ne.s32.totalorder %s67, %s69
    %p73 = scmp.eq.s32.totalorder %s12, 0
    %p74 = por %p72, %p73
    %p75 = scmp.ne.s32.totalorder %s67, %s69
    %p76 = scmp.eq.s32.totalorder %s17, 1
    %p77 = por %p75, %p76
    %p78 = scmp.ne.s32.totalorder %s69, %s70
    %p79 = scmp.eq.s32.totalorder %s17, 0
    %p80 = por %p78, %p79
    %p81 = scmp.ne.s32.totalorder %s69, %s70
    %p82 = scmp.eq.s32.totalorder %s18, 1
    %p83 = por %p81, %p82
    %p85 = scmp.ne.s32.totalorder %s70, %s84
    %p86 = scmp.eq.s32.totalorder %s18, 0
    %p87 = por %p85, %p86
    %s89 = sadd.s32 %s88, 1
    %p92 = scmp.eq.s32.totalorder %s12, 1
    %p93 = scmp.ne.s32.totalorder %s88, %s90
    %p94 = scmp.eq.s32.totalorder %s12, 0
    %p95 = por %p93, %p94
    %p96 = scmp.ne.s32.totalorder %s88, %s90
    %p97 = scmp.eq.s32.totalorder %s17, 1
    %p98 = por %p96, %p97
    %p99 = scmp.ne.s32.totalorder %s90, %s91
    %p100 = scmp.eq.s32.totalorder %s17, 0
    %p101 = por %p99, %p100
    %p102 = scmp.ne.s32.totalorder %s90, %s91
    %p103 = scmp.eq.s32.totalorder %s18, 1
    %p104 = por %p102, %p103
    %p106 = scmp.ne.s32.totalorder %s91, %s105
    %p107 = scmp.eq.s32.totalorder %s18, 0
    %p108 = por %p106, %p107
    %s110 = sadd.s32 %s109, 1
    %p113 = scmp.eq.s32.totalorder %s12, 1
    %p114 = scmp.ne.s32.totalorder %s109, %s111
    %p115 = scmp.eq.s32.totalorder %s12, 0
    %p116 = por %p114, %p115
    %p117 = scmp.ne.s32.totalorder %s109, %s111
    %p118 = scmp.eq.s32.totalorder %s17, 1
    %p119 = por %p117, %p118
    %p120 = scmp.ne.s32.totalorder %s111, %s112
    %p121 = scmp.eq.s32.totalorder %s17, 0
    %p122 = por %p120, %p121
    %p123 = scmp.ne.s32.totalorder %s111, %s112
    %p124 = scmp.eq.s32.totalorder %s18, 1
    %p125 = por %p123, %p124
    %p127 = scmp.ne.s32.totalorder %s112, %s126
    %p128 = scmp.eq.s32.totalorder %s18, 0
    %p129 = por %p127, %p128
    %s131 = sadd.s32 %s130, 1
    %p134 = scmp.eq.s32.totalorder %s12, 1
    %p135 = scmp.ne.s32.totalorder %s130, %s132
    %p136 = scmp.eq.s32.totalorder %s12, 0
    %p137 = por %p135, %p136
    %p138 = scmp.ne.s32.totalorder %s130, %s132
    %p139 = scmp.eq.s32.totalorder %s17, 1
    %p140 = por %p138, %p139
    %p141 = scmp.ne.s32.totalorder %s132, %s133
    %p142 = scmp.eq.s32.totalorder %s17, 0
    %p143 = por %p141, %p142
    %p144 = scmp.ne.s32.totalorder %s132, %s133
    %p145 = scmp.eq.s32.totalorder %s18, 1
    %p146 = por %p144, %p145
    %p148 = scmp.ne.s32.totalorder %s133, %s147
    %p149 = scmp.eq.s32.totalorder %s18, 0
    %p150 = por %p148, %p149
    %s151 = ssub.s32 %s12, %s19
    %p152 = scmp.eq.s32.totalorder %s151, 0
    %s154 = sadd.s32 %s153, 1
    %s155 = scalar_select %p152, %s153, %s154
    %p158 = pneg %p152
    %p159 = scmp.eq.s32.totalorder %s12, 1
    %p160 = por %p158, %p159
    %p161 = scmp.ne.s32.totalorder %s153, %s156
    %p162 = scmp.eq.s32.totalorder %s12, 0
    %p163 = por %p161, %p162
    %p164 = scmp.ne.s32.totalorder %s153, %s156
    %p165 = scmp.eq.s32.totalorder %s17, 1
    %p166 = por %p164, %p165
    %p167 = scmp.ne.s32.totalorder %s156, %s157
    %p168 = scmp.eq.s32.totalorder %s17, 0
    %p169 = por %p167, %p168
    %p170 = scmp.ne.s32.totalorder %s156, %s157
    %p171 = scmp.eq.s32.totalorder %s18, 1
    %p172 = por %p170, %p171
    %p174 = scmp.ne.s32.totalorder %s157, %s173
    %p175 = scmp.eq.s32.totalorder %s18, 0
    %p176 = por %p174, %p175
    %p177 = scmp.le.s32.totalorder 1, %s12
    %p178 = scmp.lt.s32.totalorder %s12, 3
    %p179 = pnand %p177, %p178
    %p180 = pneg %p179
    // Predicated region
    $region9: #{ps_upsample_conv_forward.1} parent=5 // pred_check
      _
    $region10: #{ps_upsample_conv_forward.1} parent=5 // pred_check_branch
      %182 = sbr.rel (%p179) target = $region12
    $region11: #{ps_upsample_conv_forward.1} parent=5 // pred_region
      %s183 = ssub.s32 %s12, 1
      // Predicated region
      $region13: #{ps_upsample_conv_forward.1} parent=11 // pred_check
        %p184 = pneg %p59
      $region14: #{ps_upsample_conv_forward.1} parent=11 // pred_check_branch
        %186 = sbr.rel (%p184) target = $region16
      $region15: #{ps_upsample_conv_forward.1} parent=11 // pred_region
        _
      $region16: #{ps_upsample_conv_forward.1} parent=11 // pred_fallthru
        _
      // Predicated region
      $region17: #{ps_upsample_conv_forward.1} parent=11 // pred_check
        %p187 = pneg %p80
      $region18: #{ps_upsample_conv_forward.1} parent=11 // pred_check_branch
        %189 = sbr.rel (%p187) target = $region20
      $region19: #{ps_upsample_conv_forward.1} parent=11 // pred_region
        _
      $region20: #{ps_upsample_conv_forward.1} parent=11 // pred_fallthru
        _
      // Predicated region
      $region21: #{ps_upsample_conv_forward.1} parent=11 // pred_check
        %p190 = pneg %p101
      $region22: #{ps_upsample_conv_forward.1} parent=11 // pred_check_branch
        %192 = sbr.rel (%p190) target = $region24
      $region23: #{ps_upsample_conv_forward.1} parent=11 // pred_region
        _
      $region24: #{ps_upsample_conv_forward.1} parent=11 // pred_fallthru
        _
      // Predicated region
      $region25: #{ps_upsample_conv_forward.1} parent=11 // pred_check
        %p193 = pneg %p122
      $region26: #{ps_upsample_conv_forward.1} parent=11 // pred_check_branch
        %195 = sbr.rel (%p193) target = $region28
      $region27: #{ps_upsample_conv_forward.1} parent=11 // pred_region
        _
      $region28: #{ps_upsample_conv_forward.1} parent=11 // pred_fallthru
        _
      // Predicated region
      $region29: #{ps_upsample_conv_forward.1} parent=11 // pred_check
        %p196 = pneg %p143
      $region30: #{ps_upsample_conv_forward.1} parent=11 // pred_check_branch
        %198 = sbr.rel (%p196) target = $region32
      $region31: #{ps_upsample_conv_forward.1} parent=11 // pred_region
        _
      $region32: #{ps_upsample_conv_forward.1} parent=11 // pred_fallthru
        _
    $region12: #{ps_upsample_conv_forward.1} parent=5 // pred_fallthru
      _
    %p199 = scmp.lt.s32.totalorder %s12, 2
    // Predicated region
    $region33: #{ps_upsample_conv_forward.1} parent=5 // pred_check
      %p200 = pneg %p199
    $region34: #{ps_upsample_conv_forward.1} parent=5 // pred_check_branch
      %202 = sbr.rel (%p200) target = $region36
    $region35: #{ps_upsample_conv_forward.1} parent=5 // pred_region
      // Predicated region
      $region37: #{ps_upsample_conv_forward.1} parent=35 // pred_check
        %p203 = pneg %p32
      $region38: #{ps_upsample_conv_forward.1} parent=35 // pred_check_branch
        %205 = sbr.rel (%p203) target = $region40
      $region39: #{ps_upsample_conv_forward.1} parent=35 // pred_region
        %p206 = scmp.lt.s32.totalorder %s12, 1
        %s207 = scalar_select %p206, %s12, 1
        %s208 = smul.addr %s207, 2
        %s209 = smul.addr %s208, 8
        %s210 = scalar_lea.vmem %s0, %s209
      $region40: #{ps_upsample_conv_forward.1} parent=35 // pred_fallthru
        _
    $region36: #{ps_upsample_conv_forward.1} parent=5 // pred_fallthru
      _
    %p211 = scmp.le.s32.totalorder 1, %s12
    %p212 = scmp.lt.s32.totalorder %s12, 3
    %p213 = pnand %p211, %p212
    %p214 = pneg %p213
    // Predicated region
    $region41: #{ps_upsample_conv_forward.1} parent=5 // pred_check
      _
    $region42: #{ps_upsample_conv_forward.1} parent=5 // pred_check_branch
      %216 = sbr.rel (%p213) target = $region44
    $region43: #{ps_upsample_conv_forward.1} parent=5 // pred_region
      %s217 = ssub.s32 %s12, 1
      %p218 = scmp.lt.s32.totalorder %s17, 1
      %s219 = scalar_select %p218, %s17, 1
      %s220 = smul.addr %s219, 2
      %s221 = smul.addr %s220, 8
      %s222 = scalar_lea.vmem %s0, %s221
      %p223 = pneg %p38
      %p224 = pneg %p35
      %p225 = pneg %p59
      %p226 = pneg %p56
      %p227 = pneg %p80
      %p228 = pneg %p77
      %p229 = pneg %p101
      %p230 = pneg %p98
      %p231 = pneg %p122
      %p232 = pneg %p119
      %p233 = pneg %p143
      %p234 = pneg %p140
      %p235 = pneg %p169
      %p236 = pneg %p166
      %p237 = scmp.lt.s32.totalorder %s17, 1
      %s238 = scalar_select %p237, %s17, 1
      %s239 = smul.addr %s238, 8
      %s240 = smul.addr %s239, 8
      %s241 = scalar_lea.vmem %s6, %s240
      %p242 = scmp.lt.s32.totalorder %s17, 1
      %s243 = scalar_select %p242, %s17, 1
      %s244 = smul.addr %s243, 2
      %s245 = smul.addr %s244, 8
      %s246 = scalar_lea.vmem %s0, %s245
      %p247 = scmp.lt.s32.totalorder %s17, 1
      %s248 = scalar_select %p247, %s17, 1
      %s249 = smul.addr %s248, 8
      %s250 = smul.addr %s249, 8
      %s251 = scalar_lea.vmem %s6, %s250
      %v252 = vld [vmem:[%s246] sm:$0xff]
      %v253 = vld [vmem:[%s246 + $0x8] sm:$0xff]
      %v254 = vld [vmem:[%s1] sm:$0xff]
      %v255 = vld [vmem:[%s1 + $0x8] sm:$0xff]
      %v256 = vld [vmem:[%s1 + $0x10] sm:$0xff]
      %v257 = vld [vmem:[%s1 + $0x18] sm:$0xff]
      %v258 = vld [vmem:[%s1 + $0x20] sm:$0xff]
      %v259 = vld [vmem:[%s1 + $0x28] sm:$0xff]
      %v260 = vld [vmem:[%s1 + $0x30] sm:$0xff]
      %v261 = vld [vmem:[%s1 + $0x38] sm:$0xff]
      %vm262 = vcmask 523264
      %v264 = vsel %vm262, %v252, 0
      %v267 = vsel %vm262, %v253, 0
      %269 = vmatprep.subr.mxu0 0.0
      %270 = vmatpush1.msra.mxu0 0.0
      %271 = vmatprep.subr.mxu0 0.0
      %272 = vmatpush1.msra.mxu0 0.0
      %273 = vmatprep.subr.mxu0 0.0
      %274 = vmatpush1.msra.mxu0 0.0
      %275 = vmatprep.subr.mxu0 0.0
      %276 = vmatpush1.msra.mxu0 0.0
      %277 = vmatprep.subr.mxu0 0.0
      %278 = vmatpush1.msra.mxu0 0.0
      %279 = vmatprep.subr.mxu0 0.0
      %280 = vmatpush1.msra.mxu0 0.0
      %281 = vmatprep.subr.mxu0 0.0
      %282 = vmatpush1.msra.mxu0 0.0
      %283 = vmatprep.subr.mxu0 0.0
      %284 = vmatpush1.msra.mxu0 0.0
      %285 = vmatprep.subr.mxu0 0.0
      %286 = vmatpush1.msra.mxu0 %v261
      %287 = vmatprep.subr.mxu0 0.0
      %288 = vmatpush1.msra.mxu0 %v260
      %289 = vmatprep.subr.mxu0 0.0
      %290 = vmatpush1.msra.mxu0 %v259
      %291 = vmatprep.subr.mxu0 0.0
      %292 = vmatpush1.msra.mxu0 %v258
      %293 = vmatprep.subr.mxu0 0.0
      %294 = vmatpush1.msra.mxu0 %v257
      %295 = vmatprep.subr.mxu0 0.0
      %296 = vmatpush1.msra.mxu0 %v256
      %297 = vmatprep.subr.mxu0 0.0
      %298 = vmatpush1.msra.mxu0 %v255
      %299 = vmatprep.subr.mxu0 0.0
      %300 = vmatpush1.msra.mxu0 %v254
      %301 = vmatprep.subr.mxu0 0.0
      %302 = vmatpush2.msra.mxu0 0.0
      %303 = vmatprep.subr.mxu0 0.0
      %304 = vmatpush2.msra.mxu0 0.0
      %305 = vmatprep.subr.mxu0 0.0
      %306 = vmatpush2.msra.mxu0 0.0
      %307 = vmatprep.subr.mxu0 0.0
      %308 = vmatpush2.msra.mxu0 0.0
      %309 = vmatprep.subr.mxu0 0.0
      %310 = vmatpush2.msra.mxu0 0.0
      %311 = vmatprep.subr.mxu0 0.0
      %312 = vmatpush2.msra.mxu0 0.0
      %313 = vmatprep.subr.mxu0 0.0
      %314 = vmatpush2.msra.mxu0 0.0
      %315 = vmatprep.subr.mxu0 0.0
      %316 = vmatpush2.msra.mxu0 0.0
      %317 = vmatprep.subr.mxu0 0.0
      %318 = vmatpush2.msra.mxu0 0.0
      %319 = vmatprep.subr.mxu0 0.0
      %320 = vmatpush2.msra.mxu0 0.0
      %321 = vmatprep.subr.mxu0 0.0
      %322 = vmatpush2.msra.mxu0 0.0
      %323 = vmatprep.subr.mxu0 0.0
      %324 = vmatpush2.msra.mxu0 0.0
      %325 = vmatprep.subr.mxu0 0.0
      %326 = vmatpush2.msra.mxu0 0.0
      %327 = vmatprep.subr.mxu0 0.0
      %328 = vmatpush2.msra.mxu0 0.0
      %329 = vmatprep.subr.mxu0 0.0
      %330 = vmatpush2.msra.mxu0 0.0
      %331 = vmatprep.subr.mxu0 0.0
      %332 = vmatpush2.msra.mxu0 0.0
      %333 = vmatprep.mubr.f32.mxu0 0.0
      %334 = vmatmul.mubr.f32.gmra.mxu0 %v264
      %v335 = vpop.f32.mrf.mxu0
      %v336 = vadd.f32 0.0, %v335
      %v337 = vpop.f32.mrf.mxu0
      %338 = vmatprep.mubr.f32.mxu0 0.0
      %339 = vmatmul.mubr.f32.gmra.mxu0 %v267
      %v340 = vpop.f32.mrf.mxu0
      %v341 = vadd.f32 0.0, %v340
      %v342 = vpop.f32.mrf.mxu0
      %343 = vdwg.mxu0
      %s344 = scalar_lea.vmem %s1, 64
      %v345 = vld [vmem:[%s344] sm:$0xff]
      %v346 = vld [vmem:[%s344 + $0x8] sm:$0xff]
      %v347 = vld [vmem:[%s344 + $0x10] sm:$0xff]
      %v348 = vld [vmem:[%s344 + $0x18] sm:$0xff]
      %v349 = vld [vmem:[%s344 + $0x20] sm:$0xff]
      %v350 = vld [vmem:[%s344 + $0x28] sm:$0xff]
      %v351 = vld [vmem:[%s344 + $0x30] sm:$0xff]
      %v352 = vld [vmem:[%s344 + $0x38] sm:$0xff]
      %s353 = scalar_lea.vmem %s1, 128
      %v354 = vld [vmem:[%s353] sm:$0xff]
      %v355 = vld [vmem:[%s353 + $0x8] sm:$0xff]
      %v356 = vld [vmem:[%s353 + $0x10] sm:$0xff]
      %v357 = vld [vmem:[%s353 + $0x18] sm:$0xff]
      %v358 = vld [vmem:[%s353 + $0x20] sm:$0xff]
      %v359 = vld [vmem:[%s353 + $0x28] sm:$0xff]
      %v360 = vld [vmem:[%s353 + $0x30] sm:$0xff]
      %v361 = vld [vmem:[%s353 + $0x38] sm:$0xff]
      %362 = vmatprep.subr.mxu0 0.0
      %363 = vmatpush1.msra.mxu0 0.0
      %364 = vmatprep.subr.mxu0 0.0
      %365 = vmatpush1.msra.mxu0 0.0
      %366 = vmatprep.subr.mxu0 0.0
      %367 = vmatpush1.msra.mxu0 0.0
      %368 = vmatprep.subr.mxu0 0.0
      %369 = vmatpush1.msra.mxu0 0.0
      %370 = vmatprep.subr.mxu0 0.0
      %371 = vmatpush1.msra.mxu0 0.0
      %372 = vmatprep.subr.mxu0 0.0
      %373 = vmatpush1.msra.mxu0 0.0
      %374 = vmatprep.subr.mxu0 0.0
      %375 = vmatpush1.msra.mxu0 0.0
      %376 = vmatprep.subr.mxu0 0.0
      %377 = vmatpush1.msra.mxu0 0.0
      %378 = vmatprep.subr.mxu0 0.0
      %379 = vmatpush1.msra.mxu0 %v361
      %380 = vmatprep.subr.mxu0 0.0
      %381 = vmatpush1.msra.mxu0 %v360
      %382 = vmatprep.subr.mxu0 0.0
      %383 = vmatpush1.msra.mxu0 %v359
      %384 = vmatprep.subr.mxu0 0.0
      %385 = vmatpush1.msra.mxu0 %v358
      %386 = vmatprep.subr.mxu0 0.0
      %387 = vmatpush1.msra.mxu0 %v357
      %388 = vmatprep.subr.mxu0 0.0
      %389 = vmatpush1.msra.mxu0 %v356
      %390 = vmatprep.subr.mxu0 0.0
      %391 = vmatpush1.msra.mxu0 %v355
      %392 = vmatprep.subr.mxu0 0.0
      %393 = vmatpush1.msra.mxu0 %v354
      %394 = vmatprep.subr.mxu0 0.0
      %395 = vmatpush2.msra.mxu0 0.0
      %396 = vmatprep.subr.mxu0 0.0
      %397 = vmatpush2.msra.mxu0 0.0
      %398 = vmatprep.subr.mxu0 0.0
      %399 = vmatpush2.msra.mxu0 0.0
      %400 = vmatprep.subr.mxu0 0.0
      %401 = vmatpush2.msra.mxu0 0.0
      %402 = vmatprep.subr.mxu0 0.0
      %403 = vmatpush2.msra.mxu0 0.0
      %404 = vmatprep.subr.mxu0 0.0
      %405 = vmatpush2.msra.mxu0 0.0
      %406 = vmatprep.subr.mxu0 0.0
      %407 = vmatpush2.msra.mxu0 0.0
      %408 = vmatprep.subr.mxu0 0.0
      %409 = vmatpush2.msra.mxu0 0.0
      %410 = vmatprep.subr.mxu0 0.0
      %411 = vmatpush2.msra.mxu0 0.0
      %412 = vmatprep.subr.mxu0 0.0
      %413 = vmatpush2.msra.mxu0 0.0
      %414 = vmatprep.subr.mxu0 0.0
      %415 = vmatpush2.msra.mxu0 0.0
      %416 = vmatprep.subr.mxu0 0.0
      %417 = vmatpush2.msra.mxu0 0.0
      %418 = vmatprep.subr.mxu0 0.0
      %419 = vmatpush2.msra.mxu0 0.0
      %420 = vmatprep.subr.mxu0 0.0
      %421 = vmatpush2.msra.mxu0 0.0
      %422 = vmatprep.subr.mxu0 0.0
      %423 = vmatpush2.msra.mxu0 0.0
      %424 = vmatprep.subr.mxu0 0.0
      %425 = vmatpush2.msra.mxu0 0.0
      %426 = vmatprep.mubr.f32.mxu0 0.0
      %427 = vmatmul.mubr.f32.gmra.mxu0 %v264
      %v428 = vpop.f32.mrf.mxu0
      %v429 = vadd.f32 0.0, %v428
      %v430 = vpop.f32.mrf.mxu0
      %431 = vmatprep.mubr.f32.mxu0 0.0
      %432 = vmatmul.mubr.f32.gmra.mxu0 %v267
      %v433 = vpop.f32.mrf.mxu0
      %v434 = vadd.f32 0.0, %v433
      %v435 = vpop.f32.mrf.mxu0
      %436 = vdwg.mxu0
      %v437 = vlaneseq
      %v438 = vshrl.u32 %v437, 7
      %v439 = vadd.s32 %v438, 8
      %v440 = vlaneseq
      %v441 = vand.u32 %v440, 127
      %v442 = vadd.s32 %v441, 1
      %vm443 = vcmp.eq.s32.totalorder %v438, %v442
      %vm444 = vcmp.eq.s32.totalorder %v439, %v442
      %v445 = vsel %vm443, 1, 0
      %v446 = vsel %vm444, 1, 0
      %v447 = vcvt.s32.f32 %v445
      %v448 = vcvt.s32.f32 %v446
      %v449 = vadd.s32 %v438, 1
      %v450 = vadd.s32 %v439, 1
      %vm451 = vcmp.eq.s32.totalorder %v449, %v441
      %vm452 = vcmp.eq.s32.totalorder %v450, %v441
      %v453 = vsel %vm451, 1, 0
      %v454 = vsel %vm452, 1, 0
      %v455 = vcvt.s32.f32 %v453
      %v456 = vcvt.s32.f32 %v454
      %vm457 = vcmask 130048
      %v459 = vsel %vm457, %v447, 0
      %v462 = vsel %vm457, %v448, 0
      %464 = vmatprep.subr.mxu0 0.0
      %465 = vmatpush1.msra.mxu0 0.0
      %466 = vmatprep.subr.mxu0 0.0
      %467 = vmatpush1.msra.mxu0 0.0
      %468 = vmatprep.subr.mxu0 0.0
      %469 = vmatpush1.msra.mxu0 0.0
      %470 = vmatprep.subr.mxu0 0.0
      %471 = vmatpush1.msra.mxu0 0.0
      %472 = vmatprep.subr.mxu0 0.0
      %473 = vmatpush1.msra.mxu0 0.0
      %474 = vmatprep.subr.mxu0 0.0
      %475 = vmatpush1.msra.mxu0 0.0
      %476 = vmatprep.subr.mxu0 0.0
      %477 = vmatpush1.msra.mxu0 0.0
      %478 = vmatprep.subr.mxu0 0.0
      %479 = vmatpush1.msra.mxu0 0.0
      %480 = vmatprep.subr.mxu0 0.0
      %481 = vmatpush1.msra.mxu0 0.0
      %482 = vmatprep.subr.mxu0 0.0
      %483 = vmatpush1.msra.mxu0 0.0
      %484 = vmatprep.subr.mxu0 0.0
      %485 = vmatpush1.msra.mxu0 0.0
      %486 = vmatprep.subr.mxu0 0.0
      %487 = vmatpush1.msra.mxu0 0.0
      %488 = vmatprep.subr.mxu0 0.0
      %489 = vmatpush1.msra.mxu0 0.0
      %490 = vmatprep.subr.mxu0 0.0
      %491 = vmatpush1.msra.mxu0 0.0
      %492 = vmatprep.subr.mxu0 0.0
      %493 = vmatpush1.msra.mxu0 %v341
      %494 = vmatprep.subr.mxu0 0.0
      %495 = vmatpush1.msra.mxu0 %v336
      %496 = vmatprep.subr.mxu0 0.0
      %497 = vmatpush2.msra.mxu0 0.0
      %498 = vmatprep.subr.mxu0 0.0
      %499 = vmatpush2.msra.mxu0 0.0
      %500 = vmatprep.subr.mxu0 0.0
      %501 = vmatpush2.msra.mxu0 0.0
      %502 = vmatprep.subr.mxu0 0.0
      %503 = vmatpush2.msra.mxu0 0.0
      %504 = vmatprep.subr.mxu0 0.0
      %505 = vmatpush2.msra.mxu0 0.0
      %506 = vmatprep.subr.mxu0 0.0
      %507 = vmatpush2.msra.mxu0 0.0
      %508 = vmatprep.subr.mxu0 0.0
      %509 = vmatpush2.msra.mxu0 0.0
      %510 = vmatprep.subr.mxu0 0.0
      %511 = vmatpush2.msra.mxu0 0.0
      %512 = vmatprep.subr.mxu0 0.0
      %513 = vmatpush2.msra.mxu0 0.0
      %514 = vmatprep.subr.mxu0 0.0
      %515 = vmatpush2.msra.mxu0 0.0
      %516 = vmatprep.subr.mxu0 0.0
      %517 = vmatpush2.msra.mxu0 0.0
      %518 = vmatprep.subr.mxu0 0.0
      %519 = vmatpush2.msra.mxu0 0.0
      %520 = vmatprep.subr.mxu0 0.0
      %521 = vmatpush2.msra.mxu0 0.0
      %522 = vmatprep.subr.mxu0 0.0
      %523 = vmatpush2.msra.mxu0 0.0
      %524 = vmatprep.subr.mxu0 0.0
      %525 = vmatpush2.msra.mxu0 0.0
      %526 = vmatprep.subr.mxu0 0.0
      %527 = vmatpush2.msra.mxu0 0.0
      %528 = vmatprep.mubr.f32.mxu0 0.0
      %529 = vmatmul.mubr.f32.gmra.mxu0 %v459
      %v530 = vpop.f32.mrf.mxu0
      %v531 = vadd.f32 0.0, %v530
      %v532 = vpop.f32.mrf.mxu0
      %533 = vmatprep.mubr.f32.mxu0 0.0
      %534 = vmatmul.mubr.f32.gmra.mxu0 %v462
      %v535 = vpop.f32.mrf.mxu0
      %v536 = vadd.f32 0.0, %v535
      %v537 = vpop.f32.mrf.mxu0
      %538 = vdwg.mxu0
      %539 = vmatprep.subr.mxu0 0.0
      %540 = vmatpush1.msra.mxu0 0.0
      %541 = vmatprep.subr.mxu0 0.0
      %542 = vmatpush1.msra.mxu0 0.0
      %543 = vmatprep.subr.mxu0 0.0
      %544 = vmatpush1.msra.mxu0 0.0
      %545 = vmatprep.subr.mxu0 0.0
      %546 = vmatpush1.msra.mxu0 0.0
      %547 = vmatprep.subr.mxu0 0.0
      %548 = vmatpush1.msra.mxu0 0.0
      %549 = vmatprep.subr.mxu0 0.0
      %550 = vmatpush1.msra.mxu0 0.0
      %551 = vmatprep.subr.mxu0 0.0
      %552 = vmatpush1.msra.mxu0 0.0
      %553 = vmatprep.subr.mxu0 0.0
      %554 = vmatpush1.msra.mxu0 0.0
      %555 = vmatprep.subr.mxu0 0.0
      %556 = vmatpush1.msra.mxu0 %v352
      %557 = vmatprep.subr.mxu0 0.0
      %558 = vmatpush1.msra.mxu0 %v351
      %559 = vmatprep.subr.mxu0 0.0
      %560 = vmatpush1.msra.mxu0 %v350
      %561 = vmatprep.subr.mxu0 0.0
      %562 = vmatpush1.msra.mxu0 %v349
      %563 = vmatprep.subr.mxu0 0.0
      %564 = vmatpush1.msra.mxu0 %v348
      %565 = vmatprep.subr.mxu0 0.0
      %566 = vmatpush1.msra.mxu0 %v347
      %567 = vmatprep.subr.mxu0 0.0
      %568 = vmatpush1.msra.mxu0 %v346
      %569 = vmatprep.subr.mxu0 0.0
      %570 = vmatpush1.msra.mxu0 %v345
      %571 = vmatprep.subr.mxu0 0.0
      %572 = vmatpush2.msra.mxu0 0.0
      %573 = vmatprep.subr.mxu0 0.0
      %574 = vmatpush2.msra.mxu0 0.0
      %575 = vmatprep.subr.mxu0 0.0
      %576 = vmatpush2.msra.mxu0 0.0
      %577 = vmatprep.subr.mxu0 0.0
      %578 = vmatpush2.msra.mxu0 0.0
      %579 = vmatprep.subr.mxu0 0.0
      %580 = vmatpush2.msra.mxu0 0.0
      %581 = vmatprep.subr.mxu0 0.0
      %582 = vmatpush2.msra.mxu0 0.0
      %583 = vmatprep.subr.mxu0 0.0
      %584 = vmatpush2.msra.mxu0 0.0
      %585 = vmatprep.subr.mxu0 0.0
      %586 = vmatpush2.msra.mxu0 0.0
      %587 = vmatprep.subr.mxu0 0.0
      %588 = vmatpush2.msra.mxu0 0.0
      %589 = vmatprep.subr.mxu0 0.0
      %590 = vmatpush2.msra.mxu0 0.0
      %591 = vmatprep.subr.mxu0 0.0
      %592 = vmatpush2.msra.mxu0 0.0
      %593 = vmatprep.subr.mxu0 0.0
      %594 = vmatpush2.msra.mxu0 0.0
      %595 = vmatprep.subr.mxu0 0.0
      %596 = vmatpush2.msra.mxu0 0.0
      %597 = vmatprep.subr.mxu0 0.0
      %598 = vmatpush2.msra.mxu0 0.0
      %599 = vmatprep.subr.mxu0 0.0
      %600 = vmatpush2.msra.mxu0 0.0
      %601 = vmatprep.subr.mxu0 0.0
      %602 = vmatpush2.msra.mxu0 0.0
      %603 = vmatprep.mubr.f32.mxu0 0.0
      %604 = vmatmul.mubr.f32.gmra.mxu0 %v264
      %v605 = vpop.f32.mrf.mxu0
      %v606 = vadd.f32 %v531, %v605
      %v607 = vpop.f32.mrf.mxu0
      %608 = vmatprep.mubr.f32.mxu0 0.0
      %609 = vmatmul.mubr.f32.gmra.mxu0 %v267
      %v610 = vpop.f32.mrf.mxu0
      %v611 = vadd.f32 %v536, %v610
      %v612 = vpop.f32.mrf.mxu0
      %613 = vdwg.mxu0
      %v615 = vsel %vm457, %v455, 0
      %v618 = vsel %vm457, %v456, 0
      %620 = vmatprep.subr.mxu0 0.0
      %621 = vmatpush1.msra.mxu0 0.0
      %622 = vmatprep.subr.mxu0 0.0
      %623 = vmatpush1.msra.mxu0 0.0
      %624 = vmatprep.subr.mxu0 0.0
      %625 = vmatpush1.msra.mxu0 0.0
      %626 = vmatprep.subr.mxu0 0.0
      %627 = vmatpush1.msra.mxu0 0.0
      %628 = vmatprep.subr.mxu0 0.0
      %629 = vmatpush1.msra.mxu0 0.0
      %630 = vmatprep.subr.mxu0 0.0
      %631 = vmatpush1.msra.mxu0 0.0
      %632 = vmatprep.subr.mxu0 0.0
      %633 = vmatpush1.msra.mxu0 0.0
      %634 = vmatprep.subr.mxu0 0.0
      %635 = vmatpush1.msra.mxu0 0.0
      %636 = vmatprep.subr.mxu0 0.0
      %637 = vmatpush1.msra.mxu0 0.0
      %638 = vmatprep.subr.mxu0 0.0
      %639 = vmatpush1.msra.mxu0 0.0
      %640 = vmatprep.subr.mxu0 0.0
      %641 = vmatpush1.msra.mxu0 0.0
      %642 = vmatprep.subr.mxu0 0.0
      %643 = vmatpush1.msra.mxu0 0.0
      %644 = vmatprep.subr.mxu0 0.0
      %645 = vmatpush1.msra.mxu0 0.0
      %646 = vmatprep.subr.mxu0 0.0
      %647 = vmatpush1.msra.mxu0 0.0
      %648 = vmatprep.subr.mxu0 0.0
      %649 = vmatpush1.msra.mxu0 %v434
      %650 = vmatprep.subr.mxu0 0.0
      %651 = vmatpush1.msra.mxu0 %v429
      %652 = vmatprep.subr.mxu0 0.0
      %653 = vmatpush2.msra.mxu0 0.0
      %654 = vmatprep.subr.mxu0 0.0
      %655 = vmatpush2.msra.mxu0 0.0
      %656 = vmatprep.subr.mxu0 0.0
      %657 = vmatpush2.msra.mxu0 0.0
      %658 = vmatprep.subr.mxu0 0.0
      %659 = vmatpush2.msra.mxu0 0.0
      %660 = vmatprep.subr.mxu0 0.0
      %661 = vmatpush2.msra.mxu0 0.0
      %662 = vmatprep.subr.mxu0 0.0
      %663 = vmatpush2.msra.mxu0 0.0
      %664 = vmatprep.subr.mxu0 0.0
      %665 = vmatpush2.msra.mxu0 0.0
      %666 = vmatprep.subr.mxu0 0.0
      %667 = vmatpush2.msra.mxu0 0.0
      %668 = vmatprep.subr.mxu0 0.0
      %669 = vmatpush2.msra.mxu0 0.0
      %670 = vmatprep.subr.mxu0 0.0
      %671 = vmatpush2.msra.mxu0 0.0
      %672 = vmatprep.subr.mxu0 0.0
      %673 = vmatpush2.msra.mxu0 0.0
      %674 = vmatprep.subr.mxu0 0.0
      %675 = vmatpush2.msra.mxu0 0.0
      %676 = vmatprep.subr.mxu0 0.0
      %677 = vmatpush2.msra.mxu0 0.0
      %678 = vmatprep.subr.mxu0 0.0
      %679 = vmatpush2.msra.mxu0 0.0
      %680 = vmatprep.subr.mxu0 0.0
      %681 = vmatpush2.msra.mxu0 0.0
      %682 = vmatprep.subr.mxu0 0.0
      %683 = vmatpush2.msra.mxu0 0.0
      %684 = vmatprep.mubr.f32.mxu0 0.0
      %685 = vmatmul.mubr.f32.gmra.mxu0 %v615
      %v686 = vpop.f32.mrf.mxu0
      %v687 = vadd.f32 0.0, %v686
      %v688 = vpop.f32.mrf.mxu0
      %689 = vmatprep.mubr.f32.mxu0 0.0
      %690 = vmatmul.mubr.f32.gmra.mxu0 %v618
      %v691 = vpop.f32.mrf.mxu0
      %v692 = vadd.f32 0.0, %v691
      %v693 = vpop.f32.mrf.mxu0
      %694 = vdwg.mxu0
      %v695 = vadd.f32 %v606, %v687
      %v696 = vadd.f32 %v611, %v692
      %v697 = vld [vmem:[%s2] sm:$0x1]
      %v699 = vlaneseq
      %v700 = vshrl.u32 %v699, 7
      %v701 = vsub.s32 0, %v700
      %v702 = vrot.slane %v697, %v701
      %v704 = vadd.f32 %v695, %v702
      %v705 = vadd.f32 %v696, %v702
      %v706 = vmin.f32 %v704, 20.0
      %v707 = vmin.f32 %v705, 20.0
      %v708 = vmul.f32 %v706, 1.442695
      %v709 = vpow.pop %v708
      %v710 = vmul.f32 %v707, 1.442695
      %v711 = vpow.pop %v710
      %v712 = vadd.f32 %v709, 2.0
      %v713 = vadd.f32 %v711, 2.0
      %v714 = vmul.f32 %v709, %v712
      %v715 = vmul.f32 %v711, %v713
      %v716 = vmul.f32 %v704, %v714
      %v717 = vmul.f32 %v705, %v715
      %v718 = vadd.f32 %v714, 2.0
      %v719 = vadd.f32 %v715, 2.0
      %v720 = vrcp.pop %v718
      %v721 = vrcp.pop %v719
      %v722 = vmul.f32 %v716, %v720
      %v723 = vmul.f32 %v717, %v721
      %v724 = vld [vmem:[%s3] sm:$0xff]
      %v725 = vld [vmem:[%s3 + $0x8] sm:$0xff]
      %v726 = vld [vmem:[%s3 + $0x10] sm:$0xff]
      %v727 = vld [vmem:[%s3 + $0x18] sm:$0xff]
      %v729 = vsel %vm457, %v724, 0
      %v732 = vsel %vm457, %v725, 0
      %v735 = vsel %vm457, %v726, 0
      %v738 = vsel %vm457, %v727, 0
      %740 = vmatprep.subr.mxu0 0.0
      %741 = vmatpush1.msra.mxu0 0.0
      %742 = vmatprep.subr.mxu0 0.0
      %743 = vmatpush1.msra.mxu0 0.0
      %744 = vmatprep.subr.mxu0 0.0
      %745 = vmatpush1.msra.mxu0 0.0
      %746 = vmatprep.subr.mxu0 0.0
      %747 = vmatpush1.msra.mxu0 0.0
      %748 = vmatprep.subr.mxu0 0.0
      %749 = vmatpush1.msra.mxu0 0.0
      %750 = vmatprep.subr.mxu0 0.0
      %751 = vmatpush1.msra.mxu0 0.0
      %752 = vmatprep.subr.mxu0 0.0
      %753 = vmatpush1.msra.mxu0 0.0
      %754 = vmatprep.subr.mxu0 0.0
      %755 = vmatpush1.msra.mxu0 0.0
      %756 = vmatprep.subr.mxu0 0.0
      %757 = vmatpush1.msra.mxu0 0.0
      %758 = vmatprep.subr.mxu0 0.0
      %759 = vmatpush1.msra.mxu0 0.0
      %760 = vmatprep.subr.mxu0 0.0
      %761 = vmatpush1.msra.mxu0 0.0
      %762 = vmatprep.subr.mxu0 0.0
      %763 = vmatpush1.msra.mxu0 0.0
      %764 = vmatprep.subr.mxu0 0.0
      %765 = vmatpush1.msra.mxu0 0.0
      %766 = vmatprep.subr.mxu0 0.0
      %767 = vmatpush1.msra.mxu0 0.0
      %768 = vmatprep.subr.mxu0 0.0
      %769 = vmatpush1.msra.mxu0 %v723
      %770 = vmatprep.subr.mxu0 0.0
      %771 = vmatpush1.msra.mxu0 %v722
      %772 = vmatprep.subr.mxu0 0.0
      %773 = vmatpush2.msra.mxu0 0.0
      %774 = vmatprep.subr.mxu0 0.0
      %775 = vmatpush2.msra.mxu0 0.0
      %776 = vmatprep.subr.mxu0 0.0
      %777 = vmatpush2.msra.mxu0 0.0
      %778 = vmatprep.subr.mxu0 0.0
      %779 = vmatpush2.msra.mxu0 0.0
      %780 = vmatprep.subr.mxu0 0.0
      %781 = vmatpush2.msra.mxu0 0.0
      %782 = vmatprep.subr.mxu0 0.0
      %783 = vmatpush2.msra.mxu0 0.0
      %784 = vmatprep.subr.mxu0 0.0
      %785 = vmatpush2.msra.mxu0 0.0
      %786 = vmatprep.subr.mxu0 0.0
      %787 = vmatpush2.msra.mxu0 0.0
      %788 = vmatprep.subr.mxu0 0.0
      %789 = vmatpush2.msra.mxu0 0.0
      %790 = vmatprep.subr.mxu0 0.0
      %791 = vmatpush2.msra.mxu0 0.0
      %792 = vmatprep.subr.mxu0 0.0
      %793 = vmatpush2.msra.mxu0 0.0
      %794 = vmatprep.subr.mxu0 0.0
      %795 = vmatpush2.msra.mxu0 0.0
      %796 = vmatprep.subr.mxu0 0.0
      %797 = vmatpush2.msra.mxu0 0.0
      %798 = vmatprep.subr.mxu0 0.0
      %799 = vmatpush2.msra.mxu0 0.0
      %800 = vmatprep.subr.mxu0 0.0
      %801 = vmatpush2.msra.mxu0 0.0
      %802 = vmatprep.subr.mxu0 0.0
      %803 = vmatpush2.msra.mxu0 0.0
      %804 = vmatprep.mubr.f32.mxu0 0.0
      %805 = vmatmul.mubr.f32.gmra.mxu0 %v729
      %v806 = vpop.f32.mrf.mxu0
      %v807 = vadd.f32 0.0, %v806
      %v808 = vpop.f32.mrf.mxu0
      %809 = vmatprep.mubr.f32.mxu0 0.0
      %810 = vmatmul.mubr.f32.gmra.mxu0 %v732
      %v811 = vpop.f32.mrf.mxu0
      %v812 = vadd.f32 0.0, %v811
      %v813 = vpop.f32.mrf.mxu0
      %814 = vmatprep.mubr.f32.mxu0 0.0
      %815 = vmatmul.mubr.f32.gmra.mxu0 %v735
      %v816 = vpop.f32.mrf.mxu0
      %v817 = vadd.f32 0.0, %v816
      %v818 = vpop.f32.mrf.mxu0
      %819 = vmatprep.mubr.f32.mxu0 0.0
      %820 = vmatmul.mubr.f32.gmra.mxu0 %v738
      %v821 = vpop.f32.mrf.mxu0
      %v822 = vadd.f32 0.0, %v821
      %v823 = vpop.f32.mrf.mxu0
      %824 = vdwg.mxu0
      %v825 = vld [vmem:[%s4] sm:$0xff]
      %v826 = vld [vmem:[%s4 + $0x8] sm:$0xff]
      %v827 = vld [vmem:[%s4 + $0x10] sm:$0xff]
      %v828 = vld [vmem:[%s4 + $0x18] sm:$0xff]
      %v829 = vld [vmem:[%s4 + $0x20] sm:$0xff]
      %v830 = vld [vmem:[%s4 + $0x28] sm:$0xff]
      %v831 = vld [vmem:[%s4 + $0x30] sm:$0xff]
      %v832 = vld [vmem:[%s4 + $0x38] sm:$0xff]
      %v833 = vld [vmem:[%s4 + $0x40] sm:$0xff]
      %v834 = vld [vmem:[%s4 + $0x48] sm:$0xff]
      %v835 = vld [vmem:[%s4 + $0x50] sm:$0xff]
      %v836 = vld [vmem:[%s4 + $0x58] sm:$0xff]
      %v837 = vld [vmem:[%s4 + $0x60] sm:$0xff]
      %v838 = vld [vmem:[%s4 + $0x68] sm:$0xff]
      %v839 = vld [vmem:[%s4 + $0x70] sm:$0xff]
      %v840 = vld [vmem:[%s4 + $0x78] sm:$0xff]
      %s841 = scalar_lea.vmem %s3, 32
      %v842 = vld [vmem:[%s841] sm:$0xff]
      %v843 = vld [vmem:[%s841 + $0x8] sm:$0xff]
      %v844 = vld [vmem:[%s841 + $0x10] sm:$0xff]
      %v845 = vld [vmem:[%s841 + $0x18] sm:$0xff]
      %v847 = vsel %vm457, %v842, 0
      %v850 = vsel %vm457, %v843, 0
      %v853 = vsel %vm457, %v844, 0
      %v856 = vsel %vm457, %v845, 0
      %858 = vmatprep.subr.mxu0 0.0
      %859 = vmatpush1.msra.mxu0 0.0
      %860 = vmatprep.subr.mxu0 0.0
      %861 = vmatpush1.msra.mxu0 0.0
      %862 = vmatprep.subr.mxu0 0.0
      %863 = vmatpush1.msra.mxu0 0.0
      %864 = vmatprep.subr.mxu0 0.0
      %865 = vmatpush1.msra.mxu0 0.0
      %866 = vmatprep.subr.mxu0 0.0
      %867 = vmatpush1.msra.mxu0 0.0
      %868 = vmatprep.subr.mxu0 0.0
      %869 = vmatpush1.msra.mxu0 0.0
      %870 = vmatprep.subr.mxu0 0.0
      %871 = vmatpush1.msra.mxu0 0.0
      %872 = vmatprep.subr.mxu0 0.0
      %873 = vmatpush1.msra.mxu0 0.0
      %874 = vmatprep.subr.mxu0 0.0
      %875 = vmatpush1.msra.mxu0 0.0
      %876 = vmatprep.subr.mxu0 0.0
      %877 = vmatpush1.msra.mxu0 0.0
      %878 = vmatprep.subr.mxu0 0.0
      %879 = vmatpush1.msra.mxu0 0.0
      %880 = vmatprep.subr.mxu0 0.0
      %881 = vmatpush1.msra.mxu0 0.0
      %882 = vmatprep.subr.mxu0 0.0
      %883 = vmatpush1.msra.mxu0 0.0
      %884 = vmatprep.subr.mxu0 0.0
      %885 = vmatpush1.msra.mxu0 0.0
      %886 = vmatprep.subr.mxu0 0.0
      %887 = vmatpush1.msra.mxu0 %v723
      %888 = vmatprep.subr.mxu0 0.0
      %889 = vmatpush1.msra.mxu0 %v722
      %890 = vmatprep.subr.mxu0 0.0
      %891 = vmatpush2.msra.mxu0 0.0
      %892 = vmatprep.subr.mxu0 0.0
      %893 = vmatpush2.msra.mxu0 0.0
      %894 = vmatprep.subr.mxu0 0.0
      %895 = vmatpush2.msra.mxu0 0.0
      %896 = vmatprep.subr.mxu0 0.0
      %897 = vmatpush2.msra.mxu0 0.0
      %898 = vmatprep.subr.mxu0 0.0
      %899 = vmatpush2.msra.mxu0 0.0
      %900 = vmatprep.subr.mxu0 0.0
      %901 = vmatpush2.msra.mxu0 0.0
      %902 = vmatprep.subr.mxu0 0.0
      %903 = vmatpush2.msra.mxu0 0.0
      %904 = vmatprep.subr.mxu0 0.0
      %905 = vmatpush2.msra.mxu0 0.0
      %906 = vmatprep.subr.mxu0 0.0
      %907 = vmatpush2.msra.mxu0 0.0
      %908 = vmatprep.subr.mxu0 0.0
      %909 = vmatpush2.msra.mxu0 0.0
      %910 = vmatprep.subr.mxu0 0.0
      %911 = vmatpush2.msra.mxu0 0.0
      %912 = vmatprep.subr.mxu0 0.0
      %913 = vmatpush2.msra.mxu0 0.0
      %914 = vmatprep.subr.mxu0 0.0
      %915 = vmatpush2.msra.mxu0 0.0
      %916 = vmatprep.subr.mxu0 0.0
      %917 = vmatpush2.msra.mxu0 0.0
      %918 = vmatprep.subr.mxu0 0.0
      %919 = vmatpush2.msra.mxu0 0.0
      %920 = vmatprep.subr.mxu0 0.0
      %921 = vmatpush2.msra.mxu0 0.0
      %922 = vmatprep.mubr.f32.mxu0 0.0
      %923 = vmatmul.mubr.f32.gmra.mxu0 %v847
      %v924 = vpop.f32.mrf.mxu0
      %v925 = vadd.f32 0.0, %v924
      %v926 = vpop.f32.mrf.mxu0
      %927 = vmatprep.mubr.f32.mxu0 0.0
      %928 = vmatmul.mubr.f32.gmra.mxu0 %v850
      %v929 = vpop.f32.mrf.mxu0
      %v930 = vadd.f32 0.0, %v929
      %v931 = vpop.f32.mrf.mxu0
      %932 = vmatprep.mubr.f32.mxu0 0.0
      %933 = vmatmul.mubr.f32.gmra.mxu0 %v853
      %v934 = vpop.f32.mrf.mxu0
      %v935 = vadd.f32 0.0, %v934
      %v936 = vpop.f32.mrf.mxu0
      %937 = vmatprep.mubr.f32.mxu0 0.0
      %938 = vmatmul.mubr.f32.gmra.mxu0 %v856
      %v939 = vpop.f32.mrf.mxu0
      %v940 = vadd.f32 0.0, %v939
      %v941 = vpop.f32.mrf.mxu0
      %942 = vdwg.mxu0
      %s943 = scalar_lea.vmem %s4, 128
      %v944 = vld [vmem:[%s943] sm:$0xff]
      %v945 = vld [vmem:[%s943 + $0x8] sm:$0xff]
      %v946 = vld [vmem:[%s943 + $0x10] sm:$0xff]
      %v947 = vld [vmem:[%s943 + $0x18] sm:$0xff]
      %v948 = vld [vmem:[%s943 + $0x20] sm:$0xff]
      %v949 = vld [vmem:[%s943 + $0x28] sm:$0xff]
      %v950 = vld [vmem:[%s943 + $0x30] sm:$0xff]
      %v951 = vld [vmem:[%s943 + $0x38] sm:$0xff]
      %v952 = vld [vmem:[%s943 + $0x40] sm:$0xff]
      %v953 = vld [vmem:[%s943 + $0x48] sm:$0xff]
      %v954 = vld [vmem:[%s943 + $0x50] sm:$0xff]
      %v955 = vld [vmem:[%s943 + $0x58] sm:$0xff]
      %v956 = vld [vmem:[%s943 + $0x60] sm:$0xff]
      %v957 = vld [vmem:[%s943 + $0x68] sm:$0xff]
      %v958 = vld [vmem:[%s943 + $0x70] sm:$0xff]
      %v959 = vld [vmem:[%s943 + $0x78] sm:$0xff]
      %v961 = vsel %vm262, %v925, 0
      %v964 = vsel %vm262, %v930, 0
      %v967 = vsel %vm262, %v935, 0
      %v970 = vsel %vm262, %v940, 0
      %972 = vmatprep.subr.mxu0 0.0
      %973 = vmatpush1.msra.mxu0 0.0
      %974 = vmatprep.subr.mxu0 0.0
      %975 = vmatpush1.msra.mxu0 0.0
      %976 = vmatprep.subr.mxu0 0.0
      %977 = vmatpush1.msra.mxu0 0.0
      %978 = vmatprep.subr.mxu0 0.0
      %979 = vmatpush1.msra.mxu0 0.0
      %980 = vmatprep.subr.mxu0 0.0
      %981 = vmatpush1.msra.mxu0 0.0
      %982 = vmatprep.subr.mxu0 0.0
      %983 = vmatpush1.msra.mxu0 0.0
      %984 = vmatprep.subr.mxu0 0.0
      %985 = vmatpush1.msra.mxu0 0.0
      %986 = vmatprep.subr.mxu0 0.0
      %987 = vmatpush1.msra.mxu0 0.0
      %988 = vmatprep.subr.mxu0 %v959
      %989 = vmatpush1.msra.mxu0 %v958
      %990 = vmatprep.subr.mxu0 %v957
      %991 = vmatpush1.msra.mxu0 %v956
      %992 = vmatprep.subr.mxu0 %v955
      %993 = vmatpush1.msra.mxu0 %v954
      %994 = vmatprep.subr.mxu0 %v953
      %995 = vmatpush1.msra.mxu0 %v952
      %996 = vmatprep.subr.mxu0 %v951
      %997 = vmatpush1.msra.mxu0 %v950
      %998 = vmatprep.subr.mxu0 %v949
      %999 = vmatpush1.msra.mxu0 %v948
      %1000 = vmatprep.subr.mxu0 %v947
      %1001 = vmatpush1.msra.mxu0 %v946
      %1002 = vmatprep.subr.mxu0 %v945
      %1003 = vmatpush1.msra.mxu0 %v944
      %1004 = vmatprep.subr.mxu0 0.0
      %1005 = vmatpush2.msra.mxu0 0.0
      %1006 = vmatprep.subr.mxu0 0.0
      %1007 = vmatpush2.msra.mxu0 0.0
      %1008 = vmatprep.subr.mxu0 0.0
      %1009 = vmatpush2.msra.mxu0 0.0
      %1010 = vmatprep.subr.mxu0 0.0
      %1011 = vmatpush2.msra.mxu0 0.0
      %1012 = vmatprep.subr.mxu0 0.0
      %1013 = vmatpush2.msra.mxu0 0.0
      %1014 = vmatprep.subr.mxu0 0.0
      %1015 = vmatpush2.msra.mxu0 0.0
      %1016 = vmatprep.subr.mxu0 0.0
      %1017 = vmatpush2.msra.mxu0 0.0
      %1018 = vmatprep.subr.mxu0 0.0
      %1019 = vmatpush2.msra.mxu0 0.0
      %1020 = vmatprep.subr.mxu0 0.0
      %1021 = vmatpush2.msra.mxu0 0.0
      %1022 = vmatprep.subr.mxu0 0.0
      %1023 = vmatpush2.msra.mxu0 0.0
      %1024 = vmatprep.subr.mxu0 0.0
      %1025 = vmatpush2.msra.mxu0 0.0
      %1026 = vmatprep.subr.mxu0 0.0
      %1027 = vmatpush2.msra.mxu0 0.0
      %1028 = vmatprep.subr.mxu0 0.0
      %1029 = vmatpush2.msra.mxu0 0.0
      %1030 = vmatprep.subr.mxu0 0.0
      %1031 = vmatpush2.msra.mxu0 0.0
      %1032 = vmatprep.subr.mxu0 0.0
      %1033 = vmatpush2.msra.mxu0 0.0
      %1034 = vmatprep.subr.mxu0 0.0
      %1035 = vmatpush2.msra.mxu0 0.0
      %1036 = vmatprep.mubr.f32.mxu0 0.0
      %1037 = vmatmul.mubr.f32.gmra.mxu0 %v961
      %v1038 = vpop.f32.mrf.mxu0
      %v1039 = vadd.f32 0.0, %v1038
      %v1040 = vpop.f32.mrf.mxu0
      %v1041 = vadd.f32 0.0, %v1040
      %1042 = vmatprep.mubr.f32.mxu0 0.0
      %1043 = vmatmul.mubr.f32.gmra.mxu0 %v964
      %v1044 = vpop.f32.mrf.mxu0
      %v1045 = vadd.f32 0.0, %v1044
      %v1046 = vpop.f32.mrf.mxu0
      %v1047 = vadd.f32 0.0, %v1046
      %1048 = vmatprep.mubr.f32.mxu0 0.0
      %1049 = vmatmul.mubr.f32.gmra.mxu0 %v967
      %v1050 = vpop.f32.mrf.mxu0
      %v1051 = vadd.f32 0.0, %v1050
      %v1052 = vpop.f32.mrf.mxu0
      %v1053 = vadd.f32 0.0, %v1052
      %1054 = vmatprep.mubr.f32.mxu0 0.0
      %1055 = vmatmul.mubr.f32.gmra.mxu0 %v970
      %v1056 = vpop.f32.mrf.mxu0
      %v1057 = vadd.f32 0.0, %v1056
      %v1058 = vpop.f32.mrf.mxu0
      %v1059 = vadd.f32 0.0, %v1058
      %1060 = vdwg.mxu0
      %v1062 = vsel %vm262, %v807, 0
      %v1065 = vsel %vm262, %v812, 0
      %v1068 = vsel %vm262, %v817, 0
      %v1071 = vsel %vm262, %v822, 0
      %1073 = vmatprep.subr.mxu0 0.0
      %1074 = vmatpush1.msra.mxu0 0.0
      %1075 = vmatprep.subr.mxu0 0.0
      %1076 = vmatpush1.msra.mxu0 0.0
      %1077 = vmatprep.subr.mxu0 0.0
      %1078 = vmatpush1.msra.mxu0 0.0
      %1079 = vmatprep.subr.mxu0 0.0
      %1080 = vmatpush1.msra.mxu0 0.0
      %1081 = vmatprep.subr.mxu0 0.0
      %1082 = vmatpush1.msra.mxu0 0.0
      %1083 = vmatprep.subr.mxu0 0.0
      %1084 = vmatpush1.msra.mxu0 0.0
      %1085 = vmatprep.subr.mxu0 0.0
      %1086 = vmatpush1.msra.mxu0 0.0
      %1087 = vmatprep.subr.mxu0 0.0
      %1088 = vmatpush1.msra.mxu0 0.0
      %1089 = vmatprep.subr.mxu0 %v840
      %1090 = vmatpush1.msra.mxu0 %v839
      %1091 = vmatprep.subr.mxu0 %v838
      %1092 = vmatpush1.msra.mxu0 %v837
      %1093 = vmatprep.subr.mxu0 %v836
      %1094 = vmatpush1.msra.mxu0 %v835
      %1095 = vmatprep.subr.mxu0 %v834
      %1096 = vmatpush1.msra.mxu0 %v833
      %1097 = vmatprep.subr.mxu0 %v832
      %1098 = vmatpush1.msra.mxu0 %v831
      %1099 = vmatprep.subr.mxu0 %v830
      %1100 = vmatpush1.msra.mxu0 %v829
      %1101 = vmatprep.subr.mxu0 %v828
      %1102 = vmatpush1.msra.mxu0 %v827
      %1103 = vmatprep.subr.mxu0 %v826
      %1104 = vmatpush1.msra.mxu0 %v825
      %1105 = vmatprep.subr.mxu0 0.0
      %1106 = vmatpush2.msra.mxu0 0.0
      %1107 = vmatprep.subr.mxu0 0.0
      %1108 = vmatpush2.msra.mxu0 0.0
      %1109 = vmatprep.subr.mxu0 0.0
      %1110 = vmatpush2.msra.mxu0 0.0
      %1111 = vmatprep.subr.mxu0 0.0
      %1112 = vmatpush2.msra.mxu0 0.0
      %1113 = vmatprep.subr.mxu0 0.0
      %1114 = vmatpush2.msra.mxu0 0.0
      %1115 = vmatprep.subr.mxu0 0.0
      %1116 = vmatpush2.msra.mxu0 0.0
      %1117 = vmatprep.subr.mxu0 0.0
      %1118 = vmatpush2.msra.mxu0 0.0
      %1119 = vmatprep.subr.mxu0 0.0
      %1120 = vmatpush2.msra.mxu0 0.0
      %1121 = vmatprep.subr.mxu0 0.0
      %1122 = vmatpush2.msra.mxu0 0.0
      %1123 = vmatprep.subr.mxu0 0.0
      %1124 = vmatpush2.msra.mxu0 0.0
      %1125 = vmatprep.subr.mxu0 0.0
      %1126 = vmatpush2.msra.mxu0 0.0
      %1127 = vmatprep.subr.mxu0 0.0
      %1128 = vmatpush2.msra.mxu0 0.0
      %1129 = vmatprep.subr.mxu0 0.0
      %1130 = vmatpush2.msra.mxu0 0.0
      %1131 = vmatprep.subr.mxu0 0.0
      %1132 = vmatpush2.msra.mxu0 0.0
      %1133 = vmatprep.subr.mxu0 0.0
      %1134 = vmatpush2.msra.mxu0 0.0
      %1135 = vmatprep.subr.mxu0 0.0
      %1136 = vmatpush2.msra.mxu0 0.0
      %1137 = vmatprep.mubr.f32.mxu0 0.0
      %1138 = vmatmul.mubr.f32.gmra.mxu0 %v1062
      %v1139 = vpop.f32.mrf.mxu0
      %v1140 = vadd.f32 %v1039, %v1139
      %v1141 = vpop.f32.mrf.mxu0
      %v1142 = vadd.f32 %v1041, %v1141
      %1143 = vmatprep.mubr.f32.mxu0 0.0
      %1144 = vmatmul.mubr.f32.gmra.mxu0 %v1065
      %v1145 = vpop.f32.mrf.mxu0
      %v1146 = vadd.f32 %v1045, %v1145
      %v1147 = vpop.f32.mrf.mxu0
      %v1148 = vadd.f32 %v1047, %v1147
      %1149 = vmatprep.mubr.f32.mxu0 0.0
      %1150 = vmatmul.mubr.f32.gmra.mxu0 %v1068
      %v1151 = vpop.f32.mrf.mxu0
      %v1152 = vadd.f32 %v1051, %v1151
      %v1153 = vpop.f32.mrf.mxu0
      %v1154 = vadd.f32 %v1053, %v1153
      %1155 = vmatprep.mubr.f32.mxu0 0.0
      %1156 = vmatmul.mubr.f32.gmra.mxu0 %v1071
      %v1157 = vpop.f32.mrf.mxu0
      %v1158 = vadd.f32 %v1057, %v1157
      %v1159 = vpop.f32.mrf.mxu0
      %v1160 = vadd.f32 %v1059, %v1159
      %1161 = vdwg.mxu0
      %s1162 = scalar_lea.vmem %s3, 64
      %v1163 = vld [vmem:[%s1162] sm:$0xff]
      %v1164 = vld [vmem:[%s1162 + $0x8] sm:$0xff]
      %v1165 = vld [vmem:[%s1162 + $0x10] sm:$0xff]
      %v1166 = vld [vmem:[%s1162 + $0x18] sm:$0xff]
      %v1168 = vsel %vm457, %v1163, 0
      %v1171 = vsel %vm457, %v1164, 0
      %v1174 = vsel %vm457, %v1165, 0
      %v1177 = vsel %vm457, %v1166, 0
      %1179 = vmatprep.subr.mxu0 0.0
      %1180 = vmatpush1.msra.mxu0 0.0
      %1181 = vmatprep.subr.mxu0 0.0
      %1182 = vmatpush1.msra.mxu0 0.0
      %1183 = vmatprep.subr.mxu0 0.0
      %1184 = vmatpush1.msra.mxu0 0.0
      %1185 = vmatprep.subr.mxu0 0.0
      %1186 = vmatpush1.msra.mxu0 0.0
      %1187 = vmatprep.subr.mxu0 0.0
      %1188 = vmatpush1.msra.mxu0 0.0
      %1189 = vmatprep.subr.mxu0 0.0
      %1190 = vmatpush1.msra.mxu0 0.0
      %1191 = vmatprep.subr.mxu0 0.0
      %1192 = vmatpush1.msra.mxu0 0.0
      %1193 = vmatprep.subr.mxu0 0.0
      %1194 = vmatpush1.msra.mxu0 0.0
      %1195 = vmatprep.subr.mxu0 0.0
      %1196 = vmatpush1.msra.mxu0 0.0
      %1197 = vmatprep.subr.mxu0 0.0
      %1198 = vmatpush1.msra.mxu0 0.0
      %1199 = vmatprep.subr.mxu0 0.0
      %1200 = vmatpush1.msra.mxu0 0.0
      %1201 = vmatprep.subr.mxu0 0.0
      %1202 = vmatpush1.msra.mxu0 0.0
      %1203 = vmatprep.subr.mxu0 0.0
      %1204 = vmatpush1.msra.mxu0 0.0
      %1205 = vmatprep.subr.mxu0 0.0
      %1206 = vmatpush1.msra.mxu0 0.0
      %1207 = vmatprep.subr.mxu0 0.0
      %1208 = vmatpush1.msra.mxu0 %v723
      %1209 = vmatprep.subr.mxu0 0.0
      %1210 = vmatpush1.msra.mxu0 %v722
      %1211 = vmatprep.subr.mxu0 0.0
      %1212 = vmatpush2.msra.mxu0 0.0
      %1213 = vmatprep.subr.mxu0 0.0
      %1214 = vmatpush2.msra.mxu0 0.0
      %1215 = vmatprep.subr.mxu0 0.0
      %1216 = vmatpush2.msra.mxu0 0.0
      %1217 = vmatprep.subr.mxu0 0.0
      %1218 = vmatpush2.msra.mxu0 0.0
      %1219 = vmatprep.subr.mxu0 0.0
      %1220 = vmatpush2.msra.mxu0 0.0
      %1221 = vmatprep.subr.mxu0 0.0
      %1222 = vmatpush2.msra.mxu0 0.0
      %1223 = vmatprep.subr.mxu0 0.0
      %1224 = vmatpush2.msra.mxu0 0.0
      %1225 = vmatprep.subr.mxu0 0.0
      %1226 = vmatpush2.msra.mxu0 0.0
      %1227 = vmatprep.subr.mxu0 0.0
      %1228 = vmatpush2.msra.mxu0 0.0
      %1229 = vmatprep.subr.mxu0 0.0
      %1230 = vmatpush2.msra.mxu0 0.0
      %1231 = vmatprep.subr.mxu0 0.0
      %1232 = vmatpush2.msra.mxu0 0.0
      %1233 = vmatprep.subr.mxu0 0.0
      %1234 = vmatpush2.msra.mxu0 0.0
      %1235 = vmatprep.subr.mxu0 0.0
      %1236 = vmatpush2.msra.mxu0 0.0
      %1237 = vmatprep.subr.mxu0 0.0
      %1238 = vmatpush2.msra.mxu0 0.0
      %1239 = vmatprep.subr.mxu0 0.0
      %1240 = vmatpush2.msra.mxu0 0.0
      %1241 = vmatprep.subr.mxu0 0.0
      %1242 = vmatpush2.msra.mxu0 0.0
      %1243 = vmatprep.mubr.f32.mxu0 0.0
      %1244 = vmatmul.mubr.f32.gmra.mxu0 %v1168
      %v1245 = vpop.f32.mrf.mxu0
      %v1246 = vadd.f32 0.0, %v1245
      %v1247 = vpop.f32.mrf.mxu0
      %1248 = vmatprep.mubr.f32.mxu0 0.0
      %1249 = vmatmul.mubr.f32.gmra.mxu0 %v1171
      %v1250 = vpop.f32.mrf.mxu0
      %v1251 = vadd.f32 0.0, %v1250
      %v1252 = vpop.f32.mrf.mxu0
      %1253 = vmatprep.mubr.f32.mxu0 0.0
      %1254 = vmatmul.mubr.f32.gmra.mxu0 %v1174
      %v1255 = vpop.f32.mrf.mxu0
      %v1256 = vadd.f32 0.0, %v1255
      %v1257 = vpop.f32.mrf.mxu0
      %1258 = vmatprep.mubr.f32.mxu0 0.0
      %1259 = vmatmul.mubr.f32.gmra.mxu0 %v1177
      %v1260 = vpop.f32.mrf.mxu0
      %v1261 = vadd.f32 0.0, %v1260
      %v1262 = vpop.f32.mrf.mxu0
      %1263 = vdwg.mxu0
      %s1264 = scalar_lea.vmem %s4, 256
      %v1265 = vld [vmem:[%s1264] sm:$0xff]
      %v1266 = vld [vmem:[%s1264 + $0x8] sm:$0xff]
      %v1267 = vld [vmem:[%s1264 + $0x10] sm:$0xff]
      %v1268 = vld [vmem:[%s1264 + $0x18] sm:$0xff]
      %v1269 = vld [vmem:[%s1264 + $0x20] sm:$0xff]
      %v1270 = vld [vmem:[%s1264 + $0x28] sm:$0xff]
      %v1271 = vld [vmem:[%s1264 + $0x30] sm:$0xff]
      %v1272 = vld [vmem:[%s1264 + $0x38] sm:$0xff]
      %v1273 = vld [vmem:[%s1264 + $0x40] sm:$0xff]
      %v1274 = vld [vmem:[%s1264 + $0x48] sm:$0xff]
      %v1275 = vld [vmem:[%s1264 + $0x50] sm:$0xff]
      %v1276 = vld [vmem:[%s1264 + $0x58] sm:$0xff]
      %v1277 = vld [vmem:[%s1264 + $0x60] sm:$0xff]
      %v1278 = vld [vmem:[%s1264 + $0x68] sm:$0xff]
      %v1279 = vld [vmem:[%s1264 + $0x70] sm:$0xff]
      %v1280 = vld [vmem:[%s1264 + $0x78] sm:$0xff]
      %v1282 = vsel %vm262, %v1246, 0
      %v1285 = vsel %vm262, %v1251, 0
      %v1288 = vsel %vm262, %v1256, 0
      %v1291 = vsel %vm262, %v1261, 0
      %1293 = vmatprep.subr.mxu0 0.0
      %1294 = vmatpush1.msra.mxu0 0.0
      %1295 = vmatprep.subr.mxu0 0.0
      %1296 = vmatpush1.msra.mxu0 0.0
      %1297 = vmatprep.subr.mxu0 0.0
      %1298 = vmatpush1.msra.mxu0 0.0
      %1299 = vmatprep.subr.mxu0 0.0
      %1300 = vmatpush1.msra.mxu0 0.0
      %1301 = vmatprep.subr.mxu0 0.0
      %1302 = vmatpush1.msra.mxu0 0.0
      %1303 = vmatprep.subr.mxu0 0.0
      %1304 = vmatpush1.msra.mxu0 0.0
      %1305 = vmatprep.subr.mxu0 0.0
      %1306 = vmatpush1.msra.mxu0 0.0
      %1307 = vmatprep.subr.mxu0 0.0
      %1308 = vmatpush1.msra.mxu0 0.0
      %1309 = vmatprep.subr.mxu0 %v1280
      %1310 = vmatpush1.msra.mxu0 %v1279
      %1311 = vmatprep.subr.mxu0 %v1278
      %1312 = vmatpush1.msra.mxu0 %v1277
      %1313 = vmatprep.subr.mxu0 %v1276
      %1314 = vmatpush1.msra.mxu0 %v1275
      %1315 = vmatprep.subr.mxu0 %v1274
      %1316 = vmatpush1.msra.mxu0 %v1273
      %1317 = vmatprep.subr.mxu0 %v1272
      %1318 = vmatpush1.msra.mxu0 %v1271
      %1319 = vmatprep.subr.mxu0 %v1270
      %1320 = vmatpush1.msra.mxu0 %v1269
      %1321 = vmatprep.subr.mxu0 %v1268
      %1322 = vmatpush1.msra.mxu0 %v1267
      %1323 = vmatprep.subr.mxu0 %v1266
      %1324 = vmatpush1.msra.mxu0 %v1265
      %1325 = vmatprep.subr.mxu0 0.0
      %1326 = vmatpush2.msra.mxu0 0.0
      %1327 = vmatprep.subr.mxu0 0.0
      %1328 = vmatpush2.msra.mxu0 0.0
      %1329 = vmatprep.subr.mxu0 0.0
      %1330 = vmatpush2.msra.mxu0 0.0
      %1331 = vmatprep.subr.mxu0 0.0
      %1332 = vmatpush2.msra.mxu0 0.0
      %1333 = vmatprep.subr.mxu0 0.0
      %1334 = vmatpush2.msra.mxu0 0.0
      %1335 = vmatprep.subr.mxu0 0.0
      %1336 = vmatpush2.msra.mxu0 0.0
      %1337 = vmatprep.subr.mxu0 0.0
      %1338 = vmatpush2.msra.mxu0 0.0
      %1339 = vmatprep.subr.mxu0 0.0
      %1340 = vmatpush2.msra.mxu0 0.0
      %1341 = vmatprep.subr.mxu0 0.0
      %1342 = vmatpush2.msra.mxu0 0.0
      %1343 = vmatprep.subr.mxu0 0.0
      %1344 = vmatpush2.msra.mxu0 0.0
      %1345 = vmatprep.subr.mxu0 0.0
      %1346 = vmatpush2.msra.mxu0 0.0
      %1347 = vmatprep.subr.mxu0 0.0
      %1348 = vmatpush2.msra.mxu0 0.0
      %1349 = vmatprep.subr.mxu0 0.0
      %1350 = vmatpush2.msra.mxu0 0.0
      %1351 = vmatprep.subr.mxu0 0.0
      %1352 = vmatpush2.msra.mxu0 0.0
      %1353 = vmatprep.subr.mxu0 0.0
      %1354 = vmatpush2.msra.mxu0 0.0
      %1355 = vmatprep.subr.mxu0 0.0
      %1356 = vmatpush2.msra.mxu0 0.0
      %1357 = vmatprep.mubr.f32.mxu0 0.0
      %1358 = vmatmul.mubr.f32.gmra.mxu0 %v1282
      %v1359 = vpop.f32.mrf.mxu0
      %v1360 = vadd.f32 0.0, %v1359
      %v1361 = vpop.f32.mrf.mxu0
      %v1362 = vadd.f32 0.0, %v1361
      %1363 = vmatprep.mubr.f32.mxu0 0.0
      %1364 = vmatmul.mubr.f32.gmra.mxu0 %v1285
      %v1365 = vpop.f32.mrf.mxu0
      %v1366 = vadd.f32 0.0, %v1365
      %v1367 = vpop.f32.mrf.mxu0
      %v1368 = vadd.f32 0.0, %v1367
      %1369 = vmatprep.mubr.f32.mxu0 0.0
      %1370 = vmatmul.mubr.f32.gmra.mxu0 %v1288
      %v1371 = vpop.f32.mrf.mxu0
      %v1372 = vadd.f32 0.0, %v1371
      %v1373 = vpop.f32.mrf.mxu0
      %v1374 = vadd.f32 0.0, %v1373
      %1375 = vmatprep.mubr.f32.mxu0 0.0
      %1376 = vmatmul.mubr.f32.gmra.mxu0 %v1291
      %v1377 = vpop.f32.mrf.mxu0
      %v1378 = vadd.f32 0.0, %v1377
      %v1379 = vpop.f32.mrf.mxu0
      %v1380 = vadd.f32 0.0, %v1379
      %1381 = vdwg.mxu0
      %v1382 = vadd.f32 %v1140, %v1360
      %v1383 = vadd.f32 %v1142, %v1362
      %v1384 = vadd.f32 %v1146, %v1366
      %v1385 = vadd.f32 %v1148, %v1368
      %v1386 = vadd.f32 %v1152, %v1372
      %v1387 = vadd.f32 %v1154, %v1374
      %v1388 = vadd.f32 %v1158, %v1378
      %v1389 = vadd.f32 %v1160, %v1380
      %v1390 = vld [vmem:[%s5] sm:$0x3]
      %v1392 = vlaneseq
      %v1393 = vshrl.u32 %v1392, 7
      %v1394 = vsub.s32 0, %v1393
      %v1395 = vrot.slane %v1390, %v1394
      %v1396 = vlaneseq
      %v1397 = vshrl.u32 %v1396, 7
      %v1398 = vsub.s32 1, %v1397
      %v1399 = vrot.slane %v1390, %v1398
      %v1402 = vadd.f32 %v1382, %v1395
      %v1403 = vadd.f32 %v1383, %v1399
      %v1404 = vadd.f32 %v1384, %v1395
      %v1405 = vadd.f32 %v1385, %v1399
      %v1406 = vadd.f32 %v1386, %v1395
      %v1407 = vadd.f32 %v1387, %v1399
      %v1408 = vadd.f32 %v1388, %v1395
      %v1409 = vadd.f32 %v1389, %v1399
      %v1410 = vmin.f32 %v1402, 20.0
      %v1411 = vmin.f32 %v1403, 20.0
      %v1412 = vmin.f32 %v1404, 20.0
      %v1413 = vmin.f32 %v1405, 20.0
      %v1414 = vmin.f32 %v1406, 20.0
      %v1415 = vmin.f32 %v1407, 20.0
      %v1416 = vmin.f32 %v1408, 20.0
      %v1417 = vmin.f32 %v1409, 20.0
      %v1418 = vmul.f32 %v1410, 1.442695
      %v1419 = vpow.pop %v1418
      %v1420 = vmul.f32 %v1411, 1.442695
      %v1421 = vpow.pop %v1420
      %v1422 = vmul.f32 %v1412, 1.442695
      %v1423 = vpow.pop %v1422
      %v1424 = vmul.f32 %v1413, 1.442695
      %v1425 = vpow.pop %v1424
      %v1426 = vmul.f32 %v1414, 1.442695
      %v1427 = vpow.pop %v1426
      %v1428 = vmul.f32 %v1415, 1.442695
      %v1429 = vpow.pop %v1428
      %v1430 = vmul.f32 %v1416, 1.442695
      %v1431 = vpow.pop %v1430
      %v1432 = vmul.f32 %v1417, 1.442695
      %v1433 = vpow.pop %v1432
      %v1434 = vadd.f32 %v1419, 2.0
      %v1435 = vadd.f32 %v1421, 2.0
      %v1436 = vadd.f32 %v1423, 2.0
      %v1437 = vadd.f32 %v1425, 2.0
      %v1438 = vadd.f32 %v1427, 2.0
      %v1439 = vadd.f32 %v1429, 2.0
      %v1440 = vadd.f32 %v1431, 2.0
      %v1441 = vadd.f32 %v1433, 2.0
      %v1442 = vmul.f32 %v1419, %v1434
      %v1443 = vmul.f32 %v1421, %v1435
      %v1444 = vmul.f32 %v1423, %v1436
      %v1445 = vmul.f32 %v1425, %v1437
      %v1446 = vmul.f32 %v1427, %v1438
      %v1447 = vmul.f32 %v1429, %v1439
      %v1448 = vmul.f32 %v1431, %v1440
      %v1449 = vmul.f32 %v1433, %v1441
      %v1450 = vmul.f32 %v1402, %v1442
      %v1451 = vmul.f32 %v1403, %v1443
      %v1452 = vmul.f32 %v1404, %v1444
      %v1453 = vmul.f32 %v1405, %v1445
      %v1454 = vmul.f32 %v1406, %v1446
      %v1455 = vmul.f32 %v1407, %v1447
      %v1456 = vmul.f32 %v1408, %v1448
      %v1457 = vmul.f32 %v1409, %v1449
      %v1458 = vadd.f32 %v1442, 2.0
      %v1459 = vadd.f32 %v1443, 2.0
      %v1460 = vadd.f32 %v1444, 2.0
      %v1461 = vadd.f32 %v1445, 2.0
      %v1462 = vadd.f32 %v1446, 2.0
      %v1463 = vadd.f32 %v1447, 2.0
      %v1464 = vadd.f32 %v1448, 2.0
      %v1465 = vadd.f32 %v1449, 2.0
      %v1466 = vrcp.pop %v1458
      %v1467 = vrcp.pop %v1459
      %v1468 = vrcp.pop %v1460
      %v1469 = vrcp.pop %v1461
      %v1470 = vrcp.pop %v1462
      %v1471 = vrcp.pop %v1463
      %v1472 = vrcp.pop %v1464
      %v1473 = vrcp.pop %v1465
      %v1474 = vmul.f32 %v1450, %v1466
      %v1475 = vmul.f32 %v1451, %v1467
      %v1476 = vmul.f32 %v1452, %v1468
      %v1477 = vmul.f32 %v1453, %v1469
      %v1478 = vmul.f32 %v1454, %v1470
      %v1479 = vmul.f32 %v1455, %v1471
      %v1480 = vmul.f32 %v1456, %v1472
      %v1481 = vmul.f32 %v1457, %v1473
      %1482 = vst [vmem:[%s251] sm:$0xff] %v1474
      %1483 = vst [vmem:[%s251 + $0x8] sm:$0xff] %v1475
      %1484 = vst [vmem:[%s251 + $0x10] sm:$0xff] %v1476
      %1485 = vst [vmem:[%s251 + $0x18] sm:$0xff] %v1477
      %1486 = vst [vmem:[%s251 + $0x20] sm:$0xff] %v1478
      %1487 = vst [vmem:[%s251 + $0x28] sm:$0xff] %v1479
      %1488 = vst [vmem:[%s251 + $0x30] sm:$0xff] %v1480
      %1489 = vst [vmem:[%s251 + $0x38] sm:$0xff] %v1481
      %p1490 = scmp.lt.s32.totalorder %s17, 1
      %s1491 = scalar_select %p1490, %s17, 1
      %s1492 = smul.addr %s1491, 8
      %s1493 = smul.addr %s1492, 8
      %s1494 = scalar_lea.vmem %s6, %s1493
      // Predicated region
      $region45: #{ps_upsample_conv_forward.1} parent=43 // pred_check
        %p1495 = pneg %p166
      $region46: #{ps_upsample_conv_forward.1} parent=43 // pred_check_branch
        %1497 = sbr.rel (%p1495) target = $region48
      $region47: #{ps_upsample_conv_forward.1} parent=43 // pred_region
        _
      $region48: #{ps_upsample_conv_forward.1} parent=43 // pred_fallthru
        _
    $region44: #{ps_upsample_conv_forward.1} parent=5 // pred_fallthru
      _
    %p1498 = scmp.le.s32.totalorder 2, %s12
    // Predicated region
    $region49: #{ps_upsample_conv_forward.1} parent=5 // pred_check
      %p1499 = pneg %p1498
    $region50: #{ps_upsample_conv_forward.1} parent=5 // pred_check_branch
      %1501 = sbr.rel (%p1499) target = $region52
    $region51: #{ps_upsample_conv_forward.1} parent=5 // pred_region
      %s1502 = ssub.s32 %s12, 2
      // Predicated region
      $region53: #{ps_upsample_conv_forward.1} parent=51 // pred_check
        %p1503 = pneg %p172
      $region54: #{ps_upsample_conv_forward.1} parent=51 // pred_check_branch
        %1505 = sbr.rel (%p1503) target = $region56
      $region55: #{ps_upsample_conv_forward.1} parent=51 // pred_region
        %p1506 = scmp.lt.s32.totalorder %s18, 1
        %s1507 = scalar_select %p1506, %s18, 1
        %s1508 = smul.addr %s1507, 8
        %s1509 = smul.addr %s1508, 8
        %s1510 = scalar_lea.vmem %s6, %s1509
      $region56: #{ps_upsample_conv_forward.1} parent=51 // pred_fallthru
        _
    $region52: #{ps_upsample_conv_forward.1} parent=5 // pred_fallthru
      _
  $region6: #{ps_upsample_conv_forward.1} parent=0 // loop_footer
    %s16 = sadd.s32 1, %s12
  $region7: #{ps_upsample_conv_forward.1} parent=0 // loop_footer_branch
    %11 = sbr.rel target = $region3
  $region8: #{ps_upsample_conv_forward.1} parent=0 // loop_exit
    _

</llo_original>
